<compile_context>
chip_gen: v6e
topology: v6e:2x2x1
jax: 0.10.0
libtpu: 0.0.40
codegen_flags: <defaults>
</compile_context>

<pallas_src>
import functools

import jax
import jax.numpy as jnp
from jax.experimental import pallas as pl
from jax.experimental.pallas import tpu as pltpu

_TARGET_BLOCK_BYTES = 4 << 20           # ~4 MiB blocks: amortize per-step overhead
_VMEM_LIMIT_BYTES = 48 * 1024 * 1024    # 24 MiB double-buffered footprint + headroom; < v7x 64 MiB


def _add_prompt_kernel(x_ref, prompt_ref, o_ref):
    # Purely memory-bound elementwise add; prompt broadcasts over the batch dim.
    o_ref[...] = x_ref[...] + prompt_ref[...]


def _prompt_patch(patch, prompt_size, dtype):
    """(patch * border_mask) on the tiny (C, P, P) parameter."""
    C = patch.shape[1]
    P = patch.shape[-1]
    fg = P - 2 * prompt_size
    assert fg > 0, "patch_size must be > 2 * prompt_size"
    mask = jnp.pad(
        jnp.zeros((C, fg, fg), dtype),
        ((0, 0), (prompt_size, prompt_size), (prompt_size, prompt_size)),
        constant_values=1,
    )
    return patch.reshape(C, P, P).astype(dtype) * mask      # (C, P, P)


def _sublane_multiple(itemsize):
    # f32 -> 8, bf16/f16 -> 16, int8/fp8 -> 32: sub-32-bit dtypes pack along sublanes.
    return 8 * max(1, 4 // int(itemsize))


def _choose_lane_width(total):
    for lane in (1024, 512, 256, 128):
        if total % lane == 0:
            return lane
    return None


def _choose_row_block(rows, row_bytes, itemsize):
    """Row-block (second-to-last dim) size within the byte target.

    Prefers an exact, sublane-aligned divisor of `rows`; for degenerate
    factorizations returns a capped aligned block (cdiv grid, masked tail)
    instead of blowing up to `rows`.
    """
    align = _sublane_multiple(itemsize)
    budget_rows = _TARGET_BLOCK_BYTES // max(int(row_bytes), 1)
    max_rows = max(align, (budget_rows // align) * align)
    if rows <= max_rows:
        return rows                               # whole extent in one block
    for rb in range(max_rows, 0, -align):         # exact aligned divisor: no masked tail
        if rows % rb == 0:
            return rb
    return max_rows                               # cdiv grid; Pallas masks the tail block


def _launch_add(x3, p2, block_rows, lane_like, aliases):
    """x3: (B, rows, L); p2: (rows, L).  Returns x3 + p2 (broadcast over B)."""
    B, rows, L = x3.shape
    num_r = pl.cdiv(rows, block_rows)
    if num_r > 1:
        # b varies fastest -> prompt block index (r, 0) is unchanged across the
        # inner B steps, so it is DMAed only num_r times total (not B * num_r).
        grid = (num_r, B)
        in_specs = [
            pl.BlockSpec((1, block_rows, L), lambda r, b: (b, r, 0)),
            pl.BlockSpec((block_rows, L), lambda r, b: (r, 0)),
        ]
        out_spec = pl.BlockSpec((1, block_rows, L), lambda r, b: (b, r, 0))
        dims = ("parallel", "parallel")
    else:
        # One slab per image: constant prompt index (single DMA) and B stays the
        # leading parallel axis so v7x's two TensorCores both get work.
        grid = (B,)
        in_specs = [
            pl.BlockSpec((1, block_rows, L), lambda b: (b, 0, 0)),
            pl.BlockSpec((block_rows, L), lambda b: (0, 0)),
        ]
        out_spec = pl.BlockSpec((1, block_rows, L), lambda b: (b, 0, 0))
        dims = ("parallel",)

    return pl.pallas_call(
        _add_prompt_kernel,
        out_shape=jax.ShapeDtypeStruct((B, rows, L), x3.dtype),
        grid_spec=pltpu.PrefetchScalarGridSpec(
            num_scalar_prefetch=0,
            grid=grid,
            in_specs=in_specs,
            out_specs=out_spec,
        ),
        compiler_params=pltpu.CompilerParams(
            dimension_semantics=dims,
            vmem_limit_bytes=_VMEM_LIMIT_BYTES,
        ),
        input_output_aliases=aliases,
    )(x3, p2)


def _shared_prompter_impl(x, patch, prompt_size, donate_x):
    """x: (B, C, H, W); patch: (1, C, P, P) learned parameter."""
    B, C, H, W = x.shape
    P = patch.shape[-1]
    assert H % P == 0 and W % P == 0, "H, W must be multiples of patch_size"

    pp = _prompt_patch(patch, prompt_size, x.dtype)          # (C, P, P)

    if B == 1:
        # Single-image inference: fused XLA broadcast-add never materializes the
        # full (C, H, W) prompt (the reshapes are bitcasts), reading x exactly once.
        x6 = x.reshape(B, C, H // P, P, W // P, P)
        out = x6 + pp[None, :, None, :, None, :]
        return out.reshape(B, C, H, W)

    # Full prompt image built once per call (tiny XLA op chain, amortized over B;
    # the Pallas kernel reads it from HBM exactly once thanks to the grid order).
    prompt = jnp.tile(pp, (1, H // P, W // P))                # (C, H, W)

    itemsize = jnp.dtype(x.dtype).itemsize
    total = C * H * W
    lane = _choose_lane_width(total)
    aliases = {0: 0} if donate_x else {}

    if lane is not None:
        # Lane-dense flattened layout: per-batch image as (rows, lane) with lane a
        # multiple of 128 -> every store is a wide unmasked vst.
        rows = total // lane
        rb = _choose_row_block(rows, lane * itemsize, itemsize)
        out = _launch_add(x.reshape(B, rows, lane), prompt.reshape(rows, lane),
                          rb, lane, aliases)
        return out.reshape(B, C, H, W)

    # Fallback (C*H*W not a multiple of 128): flatten to (B, C*H, W).  The last
    # block dim equals the full array dim W (satisfies the (8,128) rule even for
    # unaligned W) and C*H is tiled in ~4 MiB sublane-aligned row blocks.
    CH = C * H
    rb = _choose_row_block(CH, W * itemsize, itemsize)
    out = _launch_add(x.reshape(B, CH, W), prompt.reshape(CH, W), rb, W, aliases)
    return out.reshape(B, C, H, W)


# Default entry point: no aliasing (a pallas-level alias without real donation
# just makes XLA insert a defensive copy of x).
shared_prompter_forward = jax.jit(
    functools.partial(_shared_prompter_impl, donate_x=False),
    static_argnames=("prompt_size",),
)

# Donating entry point: x is donated at the jit boundary AND aliased to the
# kernel output, so the result reuses x's HBM pages with no defensive copy.
shared_prompter_forward_donated = jax.jit(
    functools.partial(_shared_prompter_impl, donate_x=True),
    static_argnames=("prompt_size",),
    donate_argnums=(0,),
)


def reference_forward(x, patch, prompt_size):
    B, C, H, W = x.shape
    P = patch.shape[-1]
    fg = P - 2 * prompt_size
    mask = jnp.pad(
        jnp.zeros((1, C, fg, fg), x.dtype),
        ((0, 0), (0, 0), (prompt_size, prompt_size), (prompt_size, prompt_size)),
        constant_values=1,
    )
    mask_full = jnp.tile(mask, (1, 1, H // P, W // P))
    patch_full = jnp.tile(patch.astype(x.dtype), (1, 1, H // P, W // P))
    return x + patch_full * mask_full


if __name__ == "__main__":
    key = jax.random.PRNGKey(0)

    # Case 1: lane-dense path (C*H*W multiple of 128), B >= 2.
    patch_size, prompt_size = 16, 3
    B, C, H, W = 2, 3, 32, 32
    kx, kp, key = jax.random.split(key, 3)
    x = jax.random.normal(kx, (B, C, H, W), dtype=jnp.float32)
    patch = jax.random.normal(kp, (1, C, patch_size, patch_size), dtype=jnp.float32)
    out = jax.block_until_ready(shared_prompter_forward(x, patch, prompt_size=prompt_size))
    ref = reference_forward(x, patch, prompt_size)
    assert out.shape == x.shape and out.dtype == x.dtype
    assert jnp.allclose(out, ref, atol=1e-6, rtol=1e-6)

    # Case 2: non-128-aligned fallback path (C*H*W not a multiple of 128).
    patch_size2, prompt_size2 = 8, 2
    B2, C2, H2, W2 = 2, 3, 24, 24
    kx2, kp2, key = jax.random.split(key, 3)
    x2 = jax.random.normal(kx2, (B2, C2, H2, W2), dtype=jnp.float32)
    patch2 = jax.random.normal(kp2, (1, C2, patch_size2, patch_size2), dtype=jnp.float32)
    out2 = jax.block_until_ready(shared_prompter_forward(x2, patch2, prompt_size=prompt_size2))
    ref2 = reference_forward(x2, patch2, prompt_size2)
    assert jnp.allclose(out2, ref2, atol=1e-6, rtol=1e-6)

    # Case 3: B == 1 fast path (fused XLA broadcast-add, no full prompt image).
    x3 = x[:1]
    out3 = jax.block_until_ready(shared_prompter_forward(x3, patch, prompt_size=prompt_size))
    ref3 = reference_forward(x3, patch, prompt_size)
    assert jnp.allclose(out3, ref3, atol=1e-6, rtol=1e-6)

    print("KERNEL_OK")
</pallas_src>

<mosaic_0001>
module attributes {stable_mosaic.version = 11 : i64} {
  func.func @_add_prompt_kernel(%arg0: i32, %arg1: memref<1x3x1024xf32, #tpu.memory_space<vmem>>, %arg2: memref<3x1024xf32, #tpu.memory_space<vmem>>, %arg3: memref<1x3x1024xf32, #tpu.memory_space<vmem>>) attributes {dimension_semantics = [#tpu.dimension_semantics<parallel>], iteration_bounds = array<i64: 2>, scalar_prefetch = 0 : i64, scratch_operands = 0 : i64, tpu.core_type = #tpu.core_type<tc>, window_params = [{transform_indices = @transform_0, window_bounds = array<i64: 1, 3, 1024>}, {pipeline_mode = #tpu.pipeline_mode<synchronous>, transform_indices = @transform_1, window_bounds = array<i64: 3, 1024>}, {transform_indices = @transform_2, window_bounds = array<i64: 1, 3, 1024>}]} {
    %c0 = arith.constant 0 : index
    %c0_0 = arith.constant 0 : index
    %c0_1 = arith.constant 0 : index
    %0 = vector.load %arg1[%c0, %c0_0, %c0_1] : memref<1x3x1024xf32, #tpu.memory_space<vmem>>, vector<1x3x1024xf32>
    %c0_2 = arith.constant 0 : index
    %c0_3 = arith.constant 0 : index
    %1 = vector.load %arg2[%c0_2, %c0_3] : memref<3x1024xf32, #tpu.memory_space<vmem>>, vector<3x1024xf32>
    %2 = vector.shape_cast %1 : vector<3x1024xf32> to vector<1x3x1024xf32>
    %3 = arith.addf %0, %2 : vector<1x3x1024xf32>
    %c0_4 = arith.constant 0 : index
    %c0_5 = arith.constant 0 : index
    %c0_6 = arith.constant 0 : index
    %4 = vector.load %arg3[%c0_4, %c0_5, %c0_6] : memref<1x3x1024xf32, #tpu.memory_space<vmem>>, vector<1x3x1024xf32>
    tpu.vector_store %arg3[%c0_4, %c0_5, %c0_6], %3 {strides = array<i32>} : memref<1x3x1024xf32, #tpu.memory_space<vmem>>, vector<1x3x1024xf32>,
    return
  }
  func.func @transform_0(%arg0: i32) -> (i32, i32, i32) {
    %c0_i32 = arith.constant 0 : i32
    %c0_i32_0 = arith.constant 0 : i32
    %c0_i32_1 = arith.constant 0 : i32
    return %arg0, %c0_i32, %c0_i32_0 : i32, i32, i32
  }
  func.func @transform_1(%arg0: i32) -> (i32, i32) {
    %c0_i32 = arith.constant 0 : i32
    %c0_i32_0 = arith.constant 0 : i32
    %c0_i32_1 = arith.constant 0 : i32
    return %c0_i32, %c0_i32_0 : i32, i32
  }
  func.func @transform_2(%arg0: i32) -> (i32, i32, i32) {
    %c0_i32 = arith.constant 0 : i32
    %c0_i32_0 = arith.constant 0 : i32
    %c0_i32_1 = arith.constant 0 : i32
    return %arg0, %c0_i32, %c0_i32_0 : i32, i32, i32
  }
}

</mosaic_0001>

<llo_original>
// kernel: tile.9
$region0: #{tile.9}
  %s0 = inlined_call_operand.vmem [shape: f32[3,2,16,2,16], index: 0, kind: input, shape index: {}]
  %s1 = inlined_call_operand.vmem [shape: f32[3,1024], index: 1, kind: output, shape index: {}]
  $region1: #{tile.9} parent=0
    #allocation0 [shape = 'u8[32768]{0}', space=vmem, size = 0x8000, scoped, tag = 'scoped mem for output reshape']
    #allocation1 [shape = 'u8[393216]{0}', space=vmem, size = 0x60000, scoped, tag = 'scoped mem for input reshape']
    %s3 = sshll.u32 1, 2
    %s4 = ssub.s32 %s3, 1
    %s5 = smul.addr 2, 95
    %s6 = scalar_lea.vmem %s0, %s5
    %v7 = vld [vmem:[%s6] sm:%s4]
    %s8 = scalar_lea.vmem [#allocation1], 760
    %9 = vst [vmem:[%s8] sm:%s4] %v7
    %s10 = smul.addr 2, 94
    %s11 = scalar_lea.vmem %s0, %s10
    %v12 = vld [vmem:[%s11] sm:%s4]
    %s13 = scalar_lea.vmem [#allocation1], 752
    %14 = vst [vmem:[%s13] sm:%s4] %v12
    %s15 = smul.addr 2, 93
    %s16 = scalar_lea.vmem %s0, %s15
    %v17 = vld [vmem:[%s16] sm:%s4]
    %s18 = scalar_lea.vmem [#allocation1], 744
    %19 = vst [vmem:[%s18] sm:%s4] %v17
    %s20 = smul.addr 2, 92
    %s21 = scalar_lea.vmem %s0, %s20
    %v22 = vld [vmem:[%s21] sm:%s4]
    %s23 = scalar_lea.vmem [#allocation1], 736
    %24 = vst [vmem:[%s23] sm:%s4] %v22
    %s25 = smul.addr 2, 91
    %s26 = scalar_lea.vmem %s0, %s25
    %v27 = vld [vmem:[%s26] sm:%s4]
    %s28 = scalar_lea.vmem [#allocation1], 728
    %29 = vst [vmem:[%s28] sm:%s4] %v27
    %s30 = smul.addr 2, 90
    %s31 = scalar_lea.vmem %s0, %s30
    %v32 = vld [vmem:[%s31] sm:%s4]
    %s33 = scalar_lea.vmem [#allocation1], 720
    %34 = vst [vmem:[%s33] sm:%s4] %v32
    %s35 = smul.addr 2, 89
    %s36 = scalar_lea.vmem %s0, %s35
    %v37 = vld [vmem:[%s36] sm:%s4]
    %s38 = scalar_lea.vmem [#allocation1], 712
    %39 = vst [vmem:[%s38] sm:%s4] %v37
    %s40 = smul.addr 2, 88
    %s41 = scalar_lea.vmem %s0, %s40
    %v42 = vld [vmem:[%s41] sm:%s4]
    %s43 = scalar_lea.vmem [#allocation1], 704
    %44 = vst [vmem:[%s43] sm:%s4] %v42
    %s45 = smul.addr 2, 87
    %s46 = scalar_lea.vmem %s0, %s45
    %v47 = vld [vmem:[%s46] sm:%s4]
    %s48 = scalar_lea.vmem [#allocation1], 696
    %49 = vst [vmem:[%s48] sm:%s4] %v47
    %s50 = smul.addr 2, 86
    %s51 = scalar_lea.vmem %s0, %s50
    %v52 = vld [vmem:[%s51] sm:%s4]
    %s53 = scalar_lea.vmem [#allocation1], 688
    %54 = vst [vmem:[%s53] sm:%s4] %v52
    %s55 = smul.addr 2, 85
    %s56 = scalar_lea.vmem %s0, %s55
    %v57 = vld [vmem:[%s56] sm:%s4]
    %s58 = scalar_lea.vmem [#allocation1], 680
    %59 = vst [vmem:[%s58] sm:%s4] %v57
    %s60 = smul.addr 2, 84
    %s61 = scalar_lea.vmem %s0, %s60
    %v62 = vld [vmem:[%s61] sm:%s4]
    %s63 = scalar_lea.vmem [#allocation1], 672
    %64 = vst [vmem:[%s63] sm:%s4] %v62
    %s65 = smul.addr 2, 83
    %s66 = scalar_lea.vmem %s0, %s65
    %v67 = vld [vmem:[%s66] sm:%s4]
    %s68 = scalar_lea.vmem [#allocation1], 664
    %69 = vst [vmem:[%s68] sm:%s4] %v67
    %s70 = smul.addr 2, 82
    %s71 = scalar_lea.vmem %s0, %s70
    %v72 = vld [vmem:[%s71] sm:%s4]
    %s73 = scalar_lea.vmem [#allocation1], 656
    %74 = vst [vmem:[%s73] sm:%s4] %v72
    %s75 = smul.addr 2, 81
    %s76 = scalar_lea.vmem %s0, %s75
    %v77 = vld [vmem:[%s76] sm:%s4]
    %s78 = scalar_lea.vmem [#allocation1], 648
    %79 = vst [vmem:[%s78] sm:%s4] %v77
    %s80 = smul.addr 2, 80
    %s81 = scalar_lea.vmem %s0, %s80
    %v82 = vld [vmem:[%s81] sm:%s4]
    %s83 = scalar_lea.vmem [#allocation1], 640
    %84 = vst [vmem:[%s83] sm:%s4] %v82
    %s85 = smul.addr 2, 79
    %s86 = scalar_lea.vmem %s0, %s85
    %v87 = vld [vmem:[%s86] sm:%s4]
    %s88 = scalar_lea.vmem [#allocation1], 632
    %89 = vst [vmem:[%s88] sm:%s4] %v87
    %s90 = smul.addr 2, 78
    %s91 = scalar_lea.vmem %s0, %s90
    %v92 = vld [vmem:[%s91] sm:%s4]
    %s93 = scalar_lea.vmem [#allocation1], 624
    %94 = vst [vmem:[%s93] sm:%s4] %v92
    %s95 = smul.addr 2, 77
    %s96 = scalar_lea.vmem %s0, %s95
    %v97 = vld [vmem:[%s96] sm:%s4]
    %s98 = scalar_lea.vmem [#allocation1], 616
    %99 = vst [vmem:[%s98] sm:%s4] %v97
    %s100 = smul.addr 2, 76
    %s101 = scalar_lea.vmem %s0, %s100
    %v102 = vld [vmem:[%s101] sm:%s4]
    %s103 = scalar_lea.vmem [#allocation1], 608
    %104 = vst [vmem:[%s103] sm:%s4] %v102
    %s105 = smul.addr 2, 75
    %s106 = scalar_lea.vmem %s0, %s105
    %v107 = vld [vmem:[%s106] sm:%s4]
    %s108 = scalar_lea.vmem [#allocation1], 600
    %109 = vst [vmem:[%s108] sm:%s4] %v107
    %s110 = smul.addr 2, 74
    %s111 = scalar_lea.vmem %s0, %s110
    %v112 = vld [vmem:[%s111] sm:%s4]
    %s113 = scalar_lea.vmem [#allocation1], 592
    %114 = vst [vmem:[%s113] sm:%s4] %v112
    %s115 = smul.addr 2, 73
    %s116 = scalar_lea.vmem %s0, %s115
    %v117 = vld [vmem:[%s116] sm:%s4]
    %s118 = scalar_lea.vmem [#allocation1], 584
    %119 = vst [vmem:[%s118] sm:%s4] %v117
    %s120 = smul.addr 2, 72
    %s121 = scalar_lea.vmem %s0, %s120
    %v122 = vld [vmem:[%s121] sm:%s4]
    %s123 = scalar_lea.vmem [#allocation1], 576
    %124 = vst [vmem:[%s123] sm:%s4] %v122
    %s125 = smul.addr 2, 71
    %s126 = scalar_lea.vmem %s0, %s125
    %v127 = vld [vmem:[%s126] sm:%s4]
    %s128 = scalar_lea.vmem [#allocation1], 568
    %129 = vst [vmem:[%s128] sm:%s4] %v127
    %s130 = smul.addr 2, 70
    %s131 = scalar_lea.vmem %s0, %s130
    %v132 = vld [vmem:[%s131] sm:%s4]
    %s133 = scalar_lea.vmem [#allocation1], 560
    %134 = vst [vmem:[%s133] sm:%s4] %v132
    %s135 = smul.addr 2, 69
    %s136 = scalar_lea.vmem %s0, %s135
    %v137 = vld [vmem:[%s136] sm:%s4]
    %s138 = scalar_lea.vmem [#allocation1], 552
    %139 = vst [vmem:[%s138] sm:%s4] %v137
    %s140 = smul.addr 2, 68
    %s141 = scalar_lea.vmem %s0, %s140
    %v142 = vld [vmem:[%s141] sm:%s4]
    %s143 = scalar_lea.vmem [#allocation1], 544
    %144 = vst [vmem:[%s143] sm:%s4] %v142
    %s145 = smul.addr 2, 67
    %s146 = scalar_lea.vmem %s0, %s145
    %v147 = vld [vmem:[%s146] sm:%s4]
    %s148 = scalar_lea.vmem [#allocation1], 536
    %149 = vst [vmem:[%s148] sm:%s4] %v147
    %s150 = smul.addr 2, 66
    %s151 = scalar_lea.vmem %s0, %s150
    %v152 = vld [vmem:[%s151] sm:%s4]
    %s153 = scalar_lea.vmem [#allocation1], 528
    %154 = vst [vmem:[%s153] sm:%s4] %v152
    %s155 = smul.addr 2, 65
    %s156 = scalar_lea.vmem %s0, %s155
    %v157 = vld [vmem:[%s156] sm:%s4]
    %s158 = scalar_lea.vmem [#allocation1], 520
    %159 = vst [vmem:[%s158] sm:%s4] %v157
    %s160 = smul.addr 2, 64
    %s161 = scalar_lea.vmem %s0, %s160
    %v162 = vld [vmem:[%s161] sm:%s4]
    %s163 = scalar_lea.vmem [#allocation1], 512
    %164 = vst [vmem:[%s163] sm:%s4] %v162
    %s165 = smul.addr 2, 63
    %s166 = scalar_lea.vmem %s0, %s165
    %v167 = vld [vmem:[%s166] sm:%s4]
    %s168 = scalar_lea.vmem [#allocation1], 504
    %169 = vst [vmem:[%s168] sm:%s4] %v167
    %s170 = smul.addr 2, 62
    %s171 = scalar_lea.vmem %s0, %s170
    %v172 = vld [vmem:[%s171] sm:%s4]
    %s173 = scalar_lea.vmem [#allocation1], 496
    %174 = vst [vmem:[%s173] sm:%s4] %v172
    %s175 = smul.addr 2, 61
    %s176 = scalar_lea.vmem %s0, %s175
    %v177 = vld [vmem:[%s176] sm:%s4]
    %s178 = scalar_lea.vmem [#allocation1], 488
    %179 = vst [vmem:[%s178] sm:%s4] %v177
    %s180 = smul.addr 2, 60
    %s181 = scalar_lea.vmem %s0, %s180
    %v182 = vld [vmem:[%s181] sm:%s4]
    %s183 = scalar_lea.vmem [#allocation1], 480
    %184 = vst [vmem:[%s183] sm:%s4] %v182
    %s185 = smul.addr 2, 59
    %s186 = scalar_lea.vmem %s0, %s185
    %v187 = vld [vmem:[%s186] sm:%s4]
    %s188 = scalar_lea.vmem [#allocation1], 472
    %189 = vst [vmem:[%s188] sm:%s4] %v187
    %s190 = smul.addr 2, 58
    %s191 = scalar_lea.vmem %s0, %s190
    %v192 = vld [vmem:[%s191] sm:%s4]
    %s193 = scalar_lea.vmem [#allocation1], 464
    %194 = vst [vmem:[%s193] sm:%s4] %v192
    %s195 = smul.addr 2, 57
    %s196 = scalar_lea.vmem %s0, %s195
    %v197 = vld [vmem:[%s196] sm:%s4]
    %s198 = scalar_lea.vmem [#allocation1], 456
    %199 = vst [vmem:[%s198] sm:%s4] %v197
    %s200 = smul.addr 2, 56
    %s201 = scalar_lea.vmem %s0, %s200
    %v202 = vld [vmem:[%s201] sm:%s4]
    %s203 = scalar_lea.vmem [#allocation1], 448
    %204 = vst [vmem:[%s203] sm:%s4] %v202
    %s205 = smul.addr 2, 55
    %s206 = scalar_lea.vmem %s0, %s205
    %v207 = vld [vmem:[%s206] sm:%s4]
    %s208 = scalar_lea.vmem [#allocation1], 440
    %209 = vst [vmem:[%s208] sm:%s4] %v207
    %s210 = smul.addr 2, 54
    %s211 = scalar_lea.vmem %s0, %s210
    %v212 = vld [vmem:[%s211] sm:%s4]
    %s213 = scalar_lea.vmem [#allocation1], 432
    %214 = vst [vmem:[%s213] sm:%s4] %v212
    %s215 = smul.addr 2, 53
    %s216 = scalar_lea.vmem %s0, %s215
    %v217 = vld [vmem:[%s216] sm:%s4]
    %s218 = scalar_lea.vmem [#allocation1], 424
    %219 = vst [vmem:[%s218] sm:%s4] %v217
    %s220 = smul.addr 2, 52
    %s221 = scalar_lea.vmem %s0, %s220
    %v222 = vld [vmem:[%s221] sm:%s4]
    %s223 = scalar_lea.vmem [#allocation1], 416
    %224 = vst [vmem:[%s223] sm:%s4] %v222
    %s225 = smul.addr 2, 51
    %s226 = scalar_lea.vmem %s0, %s225
    %v227 = vld [vmem:[%s226] sm:%s4]
    %s228 = scalar_lea.vmem [#allocation1], 408
    %229 = vst [vmem:[%s228] sm:%s4] %v227
    %s230 = smul.addr 2, 50
    %s231 = scalar_lea.vmem %s0, %s230
    %v232 = vld [vmem:[%s231] sm:%s4]
    %s233 = scalar_lea.vmem [#allocation1], 400
    %234 = vst [vmem:[%s233] sm:%s4] %v232
    %s235 = smul.addr 2, 49
    %s236 = scalar_lea.vmem %s0, %s235
    %v237 = vld [vmem:[%s236] sm:%s4]
    %s238 = scalar_lea.vmem [#allocation1], 392
    %239 = vst [vmem:[%s238] sm:%s4] %v237
    %s240 = smul.addr 2, 48
    %s241 = scalar_lea.vmem %s0, %s240
    %v242 = vld [vmem:[%s241] sm:%s4]
    %s243 = scalar_lea.vmem [#allocation1], 384
    %244 = vst [vmem:[%s243] sm:%s4] %v242
    %s245 = smul.addr 2, 47
    %s246 = scalar_lea.vmem %s0, %s245
    %v247 = vld [vmem:[%s246] sm:%s4]
    %s248 = scalar_lea.vmem [#allocation1], 376
    %249 = vst [vmem:[%s248] sm:%s4] %v247
    %s250 = smul.addr 2, 46
    %s251 = scalar_lea.vmem %s0, %s250
    %v252 = vld [vmem:[%s251] sm:%s4]
    %s253 = scalar_lea.vmem [#allocation1], 368
    %254 = vst [vmem:[%s253] sm:%s4] %v252
    %s255 = smul.addr 2, 45
    %s256 = scalar_lea.vmem %s0, %s255
    %v257 = vld [vmem:[%s256] sm:%s4]
    %s258 = scalar_lea.vmem [#allocation1], 360
    %259 = vst [vmem:[%s258] sm:%s4] %v257
    %s260 = smul.addr 2, 44
    %s261 = scalar_lea.vmem %s0, %s260
    %v262 = vld [vmem:[%s261] sm:%s4]
    %s263 = scalar_lea.vmem [#allocation1], 352
    %264 = vst [vmem:[%s263] sm:%s4] %v262
    %s265 = smul.addr 2, 43
    %s266 = scalar_lea.vmem %s0, %s265
    %v267 = vld [vmem:[%s266] sm:%s4]
    %s268 = scalar_lea.vmem [#allocation1], 344
    %269 = vst [vmem:[%s268] sm:%s4] %v267
    %s270 = smul.addr 2, 42
    %s271 = scalar_lea.vmem %s0, %s270
    %v272 = vld [vmem:[%s271] sm:%s4]
    %s273 = scalar_lea.vmem [#allocation1], 336
    %274 = vst [vmem:[%s273] sm:%s4] %v272
    %s275 = smul.addr 2, 41
    %s276 = scalar_lea.vmem %s0, %s275
    %v277 = vld [vmem:[%s276] sm:%s4]
    %s278 = scalar_lea.vmem [#allocation1], 328
    %279 = vst [vmem:[%s278] sm:%s4] %v277
    %s280 = smul.addr 2, 40
    %s281 = scalar_lea.vmem %s0, %s280
    %v282 = vld [vmem:[%s281] sm:%s4]
    %s283 = scalar_lea.vmem [#allocation1], 320
    %284 = vst [vmem:[%s283] sm:%s4] %v282
    %s285 = smul.addr 2, 39
    %s286 = scalar_lea.vmem %s0, %s285
    %v287 = vld [vmem:[%s286] sm:%s4]
    %s288 = scalar_lea.vmem [#allocation1], 312
    %289 = vst [vmem:[%s288] sm:%s4] %v287
    %s290 = smul.addr 2, 38
    %s291 = scalar_lea.vmem %s0, %s290
    %v292 = vld [vmem:[%s291] sm:%s4]
    %s293 = scalar_lea.vmem [#allocation1], 304
    %294 = vst [vmem:[%s293] sm:%s4] %v292
    %s295 = smul.addr 2, 37
    %s296 = scalar_lea.vmem %s0, %s295
    %v297 = vld [vmem:[%s296] sm:%s4]
    %s298 = scalar_lea.vmem [#allocation1], 296
    %299 = vst [vmem:[%s298] sm:%s4] %v297
    %s300 = smul.addr 2, 36
    %s301 = scalar_lea.vmem %s0, %s300
    %v302 = vld [vmem:[%s301] sm:%s4]
    %s303 = scalar_lea.vmem [#allocation1], 288
    %304 = vst [vmem:[%s303] sm:%s4] %v302
    %s305 = smul.addr 2, 35
    %s306 = scalar_lea.vmem %s0, %s305
    %v307 = vld [vmem:[%s306] sm:%s4]
    %s308 = scalar_lea.vmem [#allocation1], 280
    %309 = vst [vmem:[%s308] sm:%s4] %v307
    %s310 = smul.addr 2, 34
    %s311 = scalar_lea.vmem %s0, %s310
    %v312 = vld [vmem:[%s311] sm:%s4]
    %s313 = scalar_lea.vmem [#allocation1], 272
    %314 = vst [vmem:[%s313] sm:%s4] %v312
    %s315 = smul.addr 2, 33
    %s316 = scalar_lea.vmem %s0, %s315
    %v317 = vld [vmem:[%s316] sm:%s4]
    %s318 = scalar_lea.vmem [#allocation1], 264
    %319 = vst [vmem:[%s318] sm:%s4] %v317
    %s320 = smul.addr 2, 32
    %s321 = scalar_lea.vmem %s0, %s320
    %v322 = vld [vmem:[%s321] sm:%s4]
    %s323 = scalar_lea.vmem [#allocation1], 256
    %324 = vst [vmem:[%s323] sm:%s4] %v322
    %s325 = smul.addr 2, 31
    %s326 = scalar_lea.vmem %s0, %s325
    %v327 = vld [vmem:[%s326] sm:%s4]
    %s328 = scalar_lea.vmem [#allocation1], 248
    %329 = vst [vmem:[%s328] sm:%s4] %v327
    %s330 = smul.addr 2, 30
    %s331 = scalar_lea.vmem %s0, %s330
    %v332 = vld [vmem:[%s331] sm:%s4]
    %s333 = scalar_lea.vmem [#allocation1], 240
    %334 = vst [vmem:[%s333] sm:%s4] %v332
    %s335 = smul.addr 2, 29
    %s336 = scalar_lea.vmem %s0, %s335
    %v337 = vld [vmem:[%s336] sm:%s4]
    %s338 = scalar_lea.vmem [#allocation1], 232
    %339 = vst [vmem:[%s338] sm:%s4] %v337
    %s340 = smul.addr 2, 28
    %s341 = scalar_lea.vmem %s0, %s340
    %v342 = vld [vmem:[%s341] sm:%s4]
    %s343 = scalar_lea.vmem [#allocation1], 224
    %344 = vst [vmem:[%s343] sm:%s4] %v342
    %s345 = smul.addr 2, 27
    %s346 = scalar_lea.vmem %s0, %s345
    %v347 = vld [vmem:[%s346] sm:%s4]
    %s348 = scalar_lea.vmem [#allocation1], 216
    %349 = vst [vmem:[%s348] sm:%s4] %v347
    %s350 = smul.addr 2, 26
    %s351 = scalar_lea.vmem %s0, %s350
    %v352 = vld [vmem:[%s351] sm:%s4]
    %s353 = scalar_lea.vmem [#allocation1], 208
    %354 = vst [vmem:[%s353] sm:%s4] %v352
    %s355 = smul.addr 2, 25
    %s356 = scalar_lea.vmem %s0, %s355
    %v357 = vld [vmem:[%s356] sm:%s4]
    %s358 = scalar_lea.vmem [#allocation1], 200
    %359 = vst [vmem:[%s358] sm:%s4] %v357
    %s360 = smul.addr 2, 24
    %s361 = scalar_lea.vmem %s0, %s360
    %v362 = vld [vmem:[%s361] sm:%s4]
    %s363 = scalar_lea.vmem [#allocation1], 192
    %364 = vst [vmem:[%s363] sm:%s4] %v362
    %s365 = smul.addr 2, 23
    %s366 = scalar_lea.vmem %s0, %s365
    %v367 = vld [vmem:[%s366] sm:%s4]
    %s368 = scalar_lea.vmem [#allocation1], 184
    %369 = vst [vmem:[%s368] sm:%s4] %v367
    %s370 = smul.addr 2, 22
    %s371 = scalar_lea.vmem %s0, %s370
    %v372 = vld [vmem:[%s371] sm:%s4]
    %s373 = scalar_lea.vmem [#allocation1], 176
    %374 = vst [vmem:[%s373] sm:%s4] %v372
    %s375 = smul.addr 2, 21
    %s376 = scalar_lea.vmem %s0, %s375
    %v377 = vld [vmem:[%s376] sm:%s4]
    %s378 = scalar_lea.vmem [#allocation1], 168
    %379 = vst [vmem:[%s378] sm:%s4] %v377
    %s380 = smul.addr 2, 20
    %s381 = scalar_lea.vmem %s0, %s380
    %v382 = vld [vmem:[%s381] sm:%s4]
    %s383 = scalar_lea.vmem [#allocation1], 160
    %384 = vst [vmem:[%s383] sm:%s4] %v382
    %s385 = smul.addr 2, 19
    %s386 = scalar_lea.vmem %s0, %s385
    %v387 = vld [vmem:[%s386] sm:%s4]
    %s388 = scalar_lea.vmem [#allocation1], 152
    %389 = vst [vmem:[%s388] sm:%s4] %v387
    %s390 = smul.addr 2, 18
    %s391 = scalar_lea.vmem %s0, %s390
    %v392 = vld [vmem:[%s391] sm:%s4]
    %s393 = scalar_lea.vmem [#allocation1], 144
    %394 = vst [vmem:[%s393] sm:%s4] %v392
    %s395 = smul.addr 2, 17
    %s396 = scalar_lea.vmem %s0, %s395
    %v397 = vld [vmem:[%s396] sm:%s4]
    %s398 = scalar_lea.vmem [#allocation1], 136
    %399 = vst [vmem:[%s398] sm:%s4] %v397
    %s400 = smul.addr 2, 16
    %s401 = scalar_lea.vmem %s0, %s400
    %v402 = vld [vmem:[%s401] sm:%s4]
    %s403 = scalar_lea.vmem [#allocation1], 128
    %404 = vst [vmem:[%s403] sm:%s4] %v402
    %s405 = smul.addr 2, 15
    %s406 = scalar_lea.vmem %s0, %s405
    %v407 = vld [vmem:[%s406] sm:%s4]
    %s408 = scalar_lea.vmem [#allocation1], 120
    %409 = vst [vmem:[%s408] sm:%s4] %v407
    %s410 = smul.addr 2, 14
    %s411 = scalar_lea.vmem %s0, %s410
    %v412 = vld [vmem:[%s411] sm:%s4]
    %s413 = scalar_lea.vmem [#allocation1], 112
    %414 = vst [vmem:[%s413] sm:%s4] %v412
    %s415 = smul.addr 2, 13
    %s416 = scalar_lea.vmem %s0, %s415
    %v417 = vld [vmem:[%s416] sm:%s4]
    %s418 = scalar_lea.vmem [#allocation1], 104
    %419 = vst [vmem:[%s418] sm:%s4] %v417
    %s420 = smul.addr 2, 12
    %s421 = scalar_lea.vmem %s0, %s420
    %v422 = vld [vmem:[%s421] sm:%s4]
    %s423 = scalar_lea.vmem [#allocation1], 96
    %424 = vst [vmem:[%s423] sm:%s4] %v422
    %s425 = smul.addr 2, 11
    %s426 = scalar_lea.vmem %s0, %s425
    %v427 = vld [vmem:[%s426] sm:%s4]
    %s428 = scalar_lea.vmem [#allocation1], 88
    %429 = vst [vmem:[%s428] sm:%s4] %v427
    %s430 = smul.addr 2, 10
    %s431 = scalar_lea.vmem %s0, %s430
    %v432 = vld [vmem:[%s431] sm:%s4]
    %s433 = scalar_lea.vmem [#allocation1], 80
    %434 = vst [vmem:[%s433] sm:%s4] %v432
    %s435 = smul.addr 2, 9
    %s436 = scalar_lea.vmem %s0, %s435
    %v437 = vld [vmem:[%s436] sm:%s4]
    %s438 = scalar_lea.vmem [#allocation1], 72
    %439 = vst [vmem:[%s438] sm:%s4] %v437
    %s440 = smul.addr 2, 8
    %s441 = scalar_lea.vmem %s0, %s440
    %v442 = vld [vmem:[%s441] sm:%s4]
    %s443 = scalar_lea.vmem [#allocation1], 64
    %444 = vst [vmem:[%s443] sm:%s4] %v442
    %s445 = smul.addr 2, 7
    %s446 = scalar_lea.vmem %s0, %s445
    %v447 = vld [vmem:[%s446] sm:%s4]
    %s448 = scalar_lea.vmem [#allocation1], 56
    %449 = vst [vmem:[%s448] sm:%s4] %v447
    %s450 = smul.addr 2, 6
    %s451 = scalar_lea.vmem %s0, %s450
    %v452 = vld [vmem:[%s451] sm:%s4]
    %s453 = scalar_lea.vmem [#allocation1], 48
    %454 = vst [vmem:[%s453] sm:%s4] %v452
    %s455 = smul.addr 2, 5
    %s456 = scalar_lea.vmem %s0, %s455
    %v457 = vld [vmem:[%s456] sm:%s4]
    %s458 = scalar_lea.vmem [#allocation1], 40
    %459 = vst [vmem:[%s458] sm:%s4] %v457
    %s460 = smul.addr 2, 4
    %s461 = scalar_lea.vmem %s0, %s460
    %v462 = vld [vmem:[%s461] sm:%s4]
    %s463 = scalar_lea.vmem [#allocation1], 32
    %464 = vst [vmem:[%s463] sm:%s4] %v462
    %s465 = smul.addr 2, 3
    %s466 = scalar_lea.vmem %s0, %s465
    %v467 = vld [vmem:[%s466] sm:%s4]
    %s468 = scalar_lea.vmem [#allocation1], 24
    %469 = vst [vmem:[%s468] sm:%s4] %v467
    %s470 = smul.addr 2, 2
    %s471 = scalar_lea.vmem %s0, %s470
    %v472 = vld [vmem:[%s471] sm:%s4]
    %s473 = scalar_lea.vmem [#allocation1], 16
    %474 = vst [vmem:[%s473] sm:%s4] %v472
    %s475 = scalar_lea.vmem %s0, 2
    %v476 = vld [vmem:[%s475] sm:%s4]
    %s477 = scalar_lea.vmem [#allocation1], 8
    %478 = vst [vmem:[%s477] sm:%s4] %v476
    %v479 = vld [vmem:[%s0] sm:%s4]
    %480 = vst [vmem:[#allocation1] sm:%s4] %v479
    %v481 = vld [vmem:[#allocation1] sm:$0x1]
    %s482 = scalar_lea.vmem [#allocation1], 31
    %v483 = vld [vmem:[%s482] sm:$0x2]
    %vm484 = vcmask 1041409
    %v485 = vsel %vm484, %v483, %v481
    %s486 = scalar_lea.vmem [#allocation1], 62
    %v487 = vld [vmem:[%s486] sm:$0x4]
    %vm488 = vcmask 1042434
    %v489 = vsel %vm488, %v487, %v485
    %s490 = scalar_lea.vmem [#allocation1], 93
    %v491 = vld [vmem:[%s490] sm:$0x8]
    %vm492 = vcmask 1043459
    %v493 = vsel %vm492, %v491, %v489
    %s494 = scalar_lea.vmem [#allocation1], 124
    %v495 = vld [vmem:[%s494] sm:$0x10]
    %vm496 = vcmask 1044484
    %v497 = vsel %vm496, %v495, %v493
    %s498 = scalar_lea.vmem [#allocation1], 155
    %v499 = vld [vmem:[%s498] sm:$0x20]
    %vm500 = vcmask 1045509
    %v501 = vsel %vm500, %v499, %v497
    %s502 = scalar_lea.vmem [#allocation1], 186
    %v503 = vld [vmem:[%s502] sm:$0x40]
    %vm504 = vcmask 1046534
    %v505 = vsel %vm504, %v503, %v501
    %s506 = scalar_lea.vmem [#allocation1], 217
    %v507 = vld [vmem:[%s506] sm:$0x80]
    %vm508 = vcmask 1047559
    %v509 = vsel %vm508, %v507, %v505
    %vm510 = vcmask 130048
    %511 = vst.msk [vmem:[#allocation0] ss:$8 sm:$0xf] %vm510, %v509
    %512 = vst.msk [vmem:[#allocation0] ss:$8 sm:$0xf0] %vm510, %v509
    %s513 = scalar_lea.vmem [#allocation1], 256
    %v514 = vld [vmem:[%s513] sm:$0x1]
    %s515 = scalar_lea.vmem [#allocation1], 287
    %v516 = vld [vmem:[%s515] sm:$0x2]
    %vm517 = vcmask 1041409
    %v518 = vsel %vm517, %v516, %v514
    %s519 = scalar_lea.vmem [#allocation1], 318
    %v520 = vld [vmem:[%s519] sm:$0x4]
    %vm521 = vcmask 1042434
    %v522 = vsel %vm521, %v520, %v518
    %s523 = scalar_lea.vmem [#allocation1], 349
    %v524 = vld [vmem:[%s523] sm:$0x8]
    %vm525 = vcmask 1043459
    %v526 = vsel %vm525, %v524, %v522
    %s527 = scalar_lea.vmem [#allocation1], 380
    %v528 = vld [vmem:[%s527] sm:$0x10]
    %vm529 = vcmask 1044484
    %v530 = vsel %vm529, %v528, %v526
    %s531 = scalar_lea.vmem [#allocation1], 411
    %v532 = vld [vmem:[%s531] sm:$0x20]
    %vm533 = vcmask 1045509
    %v534 = vsel %vm533, %v532, %v530
    %s535 = scalar_lea.vmem [#allocation1], 442
    %v536 = vld [vmem:[%s535] sm:$0x40]
    %vm537 = vcmask 1046534
    %v538 = vsel %vm537, %v536, %v534
    %s539 = scalar_lea.vmem [#allocation1], 473
    %v540 = vld [vmem:[%s539] sm:$0x80]
    %vm541 = vcmask 1047559
    %v542 = vsel %vm541, %v540, %v538
    %vm543 = vcmask 130048
    %s544 = scalar_lea.vmem [#allocation0], 1
    %545 = vst.msk [vmem:[%s544] ss:$8 sm:$0xf] %vm543, %v542
    %s546 = scalar_lea.vmem [#allocation0], 1
    %547 = vst.msk [vmem:[%s546] ss:$8 sm:$0xf0] %vm543, %v542
    %s548 = scalar_lea.vmem [#allocation1], 512
    %v549 = vld [vmem:[%s548] sm:$0x1]
    %s550 = scalar_lea.vmem [#allocation1], 543
    %v551 = vld [vmem:[%s550] sm:$0x2]
    %vm552 = vcmask 1041409
    %v553 = vsel %vm552, %v551, %v549
    %s554 = scalar_lea.vmem [#allocation1], 574
    %v555 = vld [vmem:[%s554] sm:$0x4]
    %vm556 = vcmask 1042434
    %v557 = vsel %vm556, %v555, %v553
    %s558 = scalar_lea.vmem [#allocation1], 605
    %v559 = vld [vmem:[%s558] sm:$0x8]
    %vm560 = vcmask 1043459
    %v561 = vsel %vm560, %v559, %v557
    %s562 = scalar_lea.vmem [#allocation1], 636
    %v563 = vld [vmem:[%s562] sm:$0x10]
    %vm564 = vcmask 1044484
    %v565 = vsel %vm564, %v563, %v561
    %s566 = scalar_lea.vmem [#allocation1], 667
    %v567 = vld [vmem:[%s566] sm:$0x20]
    %vm568 = vcmask 1045509
    %v569 = vsel %vm568, %v567, %v565
    %s570 = scalar_lea.vmem [#allocation1], 698
    %v571 = vld [vmem:[%s570] sm:$0x40]
    %vm572 = vcmask 1046534
    %v573 = vsel %vm572, %v571, %v569
    %s574 = scalar_lea.vmem [#allocation1], 729
    %v575 = vld [vmem:[%s574] sm:$0x80]
    %vm576 = vcmask 1047559
    %v577 = vsel %vm576, %v575, %v573
    %vm578 = vcmask 130048
    %s579 = scalar_lea.vmem [#allocation0], 2
    %580 = vst.msk [vmem:[%s579] ss:$8 sm:$0xf] %vm578, %v577
    %s581 = scalar_lea.vmem [#allocation0], 2
    %582 = vst.msk [vmem:[%s581] ss:$8 sm:$0xf0] %vm578, %v577
    %s583 = scalar_lea.vmem [#allocation1], 25
    %v584 = vld [vmem:[%s583] sm:$0x1]
    %s585 = scalar_lea.vmem [#allocation1], 280
    %v586 = vld [vmem:[%s585] sm:$0x2]
    %vm587 = vcmask 1041409
    %v588 = vsel %vm587, %v586, %v584
    %s589 = scalar_lea.vmem [#allocation1], 535
    %v590 = vld [vmem:[%s589] sm:$0x4]
    %vm591 = vcmask 1042434
    %v592 = vsel %vm591, %v590, %v588
    %s593 = scalar_lea.vmem [#allocation1], 54
    %v594 = vld [vmem:[%s593] sm:$0x8]
    %vm595 = vcmask 1043459
    %v596 = vsel %vm595, %v594, %v592
    %s597 = scalar_lea.vmem [#allocation1], 309
    %v598 = vld [vmem:[%s597] sm:$0x10]
    %vm599 = vcmask 1044484
    %v600 = vsel %vm599, %v598, %v596
    %s601 = scalar_lea.vmem [#allocation1], 564
    %v602 = vld [vmem:[%s601] sm:$0x20]
    %vm603 = vcmask 1045509
    %v604 = vsel %vm603, %v602, %v600
    %s605 = scalar_lea.vmem [#allocation1], 83
    %v606 = vld [vmem:[%s605] sm:$0x40]
    %vm607 = vcmask 1046534
    %v608 = vsel %vm607, %v606, %v604
    %s609 = scalar_lea.vmem [#allocation1], 338
    %v610 = vld [vmem:[%s609] sm:$0x80]
    %vm611 = vcmask 1047559
    %v612 = vsel %vm611, %v610, %v608
    %613 = vrot.lane.b32.xlu0 %v612, 112
    %v614 = vpop.permute.xlu0 %613
    %vm615 = vcmask 1048448
    %616 = vst.msk [vmem:[#allocation0] sm:$0x7] %vm615, %v614
    %s617 = scalar_lea.vmem [#allocation0], 5
    %618 = vst.msk [vmem:[%s617] sm:$0x38] %vm615, %v614
    %s619 = scalar_lea.vmem [#allocation0], 10
    %620 = vst.msk [vmem:[%s619] sm:$0xc0] %vm615, %v614
    %s621 = scalar_lea.vmem [#allocation1], 153
    %v622 = vld [vmem:[%s621] sm:$0x1]
    %s623 = scalar_lea.vmem [#allocation1], 408
    %v624 = vld [vmem:[%s623] sm:$0x2]
    %vm625 = vcmask 1041409
    %v626 = vsel %vm625, %v624, %v622
    %s627 = scalar_lea.vmem [#allocation1], 663
    %v628 = vld [vmem:[%s627] sm:$0x4]
    %vm629 = vcmask 1042434
    %v630 = vsel %vm629, %v628, %v626
    %s631 = scalar_lea.vmem [#allocation1], 182
    %v632 = vld [vmem:[%s631] sm:$0x8]
    %vm633 = vcmask 1043459
    %v634 = vsel %vm633, %v632, %v630
    %s635 = scalar_lea.vmem [#allocation1], 437
    %v636 = vld [vmem:[%s635] sm:$0x10]
    %vm637 = vcmask 1044484
    %v638 = vsel %vm637, %v636, %v634
    %s639 = scalar_lea.vmem [#allocation1], 692
    %v640 = vld [vmem:[%s639] sm:$0x20]
    %vm641 = vcmask 1045509
    %v642 = vsel %vm641, %v640, %v638
    %s643 = scalar_lea.vmem [#allocation1], 211
    %v644 = vld [vmem:[%s643] sm:$0x40]
    %vm645 = vcmask 1046534
    %v646 = vsel %vm645, %v644, %v642
    %s647 = scalar_lea.vmem [#allocation1], 466
    %v648 = vld [vmem:[%s647] sm:$0x80]
    %vm649 = vcmask 1047559
    %v650 = vsel %vm649, %v648, %v646
    %651 = vrot.lane.b32.xlu0 %v650, 112
    %v652 = vpop.permute.xlu0 %651
    %vm653 = vcmask 1048448
    %s654 = scalar_lea.vmem [#allocation0], 32
    %655 = vst.msk [vmem:[%s654] sm:$0x7] %vm653, %v652
    %s656 = scalar_lea.vmem [#allocation0], 37
    %657 = vst.msk [vmem:[%s656] sm:$0x38] %vm653, %v652
    %s658 = scalar_lea.vmem [#allocation0], 42
    %659 = vst.msk [vmem:[%s658] sm:$0xc0] %vm653, %v652
    %s660 = scalar_lea.vmem [#allocation1], 601
    %v661 = vld [vmem:[%s660] sm:$0x1]
    %s662 = scalar_lea.vmem [#allocation1], 120
    %v663 = vld [vmem:[%s662] sm:$0x2]
    %vm664 = vcmask 1041409
    %v665 = vsel %vm664, %v663, %v661
    %s666 = scalar_lea.vmem [#allocation1], 375
    %v667 = vld [vmem:[%s666] sm:$0x4]
    %vm668 = vcmask 1042434
    %v669 = vsel %vm668, %v667, %v665
    %s670 = scalar_lea.vmem [#allocation1], 630
    %v671 = vld [vmem:[%s670] sm:$0x8]
    %vm672 = vcmask 1043459
    %v673 = vsel %vm672, %v671, %v669
    %s674 = scalar_lea.vmem [#allocation1], 725
    %v675 = vld [vmem:[%s674] sm:$0x10]
    %vm676 = vcmask 1044484
    %v677 = vsel %vm676, %v675, %v673
    %s678 = scalar_lea.vmem [#allocation1], 244
    %v679 = vld [vmem:[%s678] sm:$0x20]
    %vm680 = vcmask 1045509
    %v681 = vsel %vm680, %v679, %v677
    %s682 = scalar_lea.vmem [#allocation1], 499
    %v683 = vld [vmem:[%s682] sm:$0x40]
    %vm684 = vcmask 1046534
    %v685 = vsel %vm684, %v683, %v681
    %s686 = scalar_lea.vmem [#allocation1], 754
    %v687 = vld [vmem:[%s686] sm:$0x80]
    %vm688 = vcmask 1047559
    %v689 = vsel %vm688, %v687, %v685
    %690 = vrot.lane.b32.xlu0 %v689, 112
    %v691 = vpop.permute.xlu0 %690
    %vm692 = vcmask 1048448
    %s693 = scalar_lea.vmem [#allocation0], 18
    %694 = vst.msk [vmem:[%s693] ss:$6 sm:$0x3] %vm692, %v691
    %s695 = scalar_lea.vmem [#allocation0], 23
    %696 = vst.msk [vmem:[%s695] sm:$0xc] %vm692, %v691
    %s697 = scalar_lea.vmem [#allocation0], 26
    %698 = vst.msk [vmem:[%s697] ss:$6 sm:$0x30] %vm692, %v691
    %s699 = scalar_lea.vmem [#allocation0], 51
    %700 = vst.msk [vmem:[%s699] sm:$0xc0] %vm692, %v691
    %s701 = scalar_lea.vmem [#allocation1], 24
    %v702 = vld [vmem:[%s701] sm:$0x1]
    %s703 = scalar_lea.vmem [#allocation1], 279
    %v704 = vld [vmem:[%s703] sm:$0x2]
    %vm705 = vcmask 1041409
    %v706 = vsel %vm705, %v704, %v702
    %s707 = scalar_lea.vmem [#allocation1], 534
    %v708 = vld [vmem:[%s707] sm:$0x4]
    %vm709 = vcmask 1042434
    %v710 = vsel %vm709, %v708, %v706
    %s711 = scalar_lea.vmem [#allocation1], 53
    %v712 = vld [vmem:[%s711] sm:$0x8]
    %vm713 = vcmask 1043459
    %v714 = vsel %vm713, %v712, %v710
    %s715 = scalar_lea.vmem [#allocation1], 308
    %v716 = vld [vmem:[%s715] sm:$0x10]
    %vm717 = vcmask 1044484
    %v718 = vsel %vm717, %v716, %v714
    %s719 = scalar_lea.vmem [#allocation1], 563
    %v720 = vld [vmem:[%s719] sm:$0x20]
    %vm721 = vcmask 1045509
    %v722 = vsel %vm721, %v720, %v718
    %s723 = scalar_lea.vmem [#allocation1], 82
    %v724 = vld [vmem:[%s723] sm:$0x40]
    %vm725 = vcmask 1046534
    %v726 = vsel %vm725, %v724, %v722
    %s727 = scalar_lea.vmem [#allocation1], 337
    %v728 = vld [vmem:[%s727] sm:$0x80]
    %vm729 = vcmask 1047559
    %v730 = vsel %vm729, %v728, %v726
    %731 = vrot.lane.b32.xlu0 %v730, 96
    %v732 = vpop.permute.xlu0 %731
    %vm733 = vcmask 917248
    %734 = vst.msk [vmem:[#allocation0] sm:$0x7] %vm733, %v732
    %s735 = scalar_lea.vmem [#allocation0], 5
    %736 = vst.msk [vmem:[%s735] sm:$0x38] %vm733, %v732
    %s737 = scalar_lea.vmem [#allocation0], 10
    %738 = vst.msk [vmem:[%s737] sm:$0xc0] %vm733, %v732
    %s739 = scalar_lea.vmem [#allocation1], 152
    %v740 = vld [vmem:[%s739] sm:$0x1]
    %s741 = scalar_lea.vmem [#allocation1], 407
    %v742 = vld [vmem:[%s741] sm:$0x2]
    %vm743 = vcmask 1041409
    %v744 = vsel %vm743, %v742, %v740
    %s745 = scalar_lea.vmem [#allocation1], 662
    %v746 = vld [vmem:[%s745] sm:$0x4]
    %vm747 = vcmask 1042434
    %v748 = vsel %vm747, %v746, %v744
    %s749 = scalar_lea.vmem [#allocation1], 181
    %v750 = vld [vmem:[%s749] sm:$0x8]
    %vm751 = vcmask 1043459
    %v752 = vsel %vm751, %v750, %v748
    %s753 = scalar_lea.vmem [#allocation1], 436
    %v754 = vld [vmem:[%s753] sm:$0x10]
    %vm755 = vcmask 1044484
    %v756 = vsel %vm755, %v754, %v752
    %s757 = scalar_lea.vmem [#allocation1], 691
    %v758 = vld [vmem:[%s757] sm:$0x20]
    %vm759 = vcmask 1045509
    %v760 = vsel %vm759, %v758, %v756
    %s761 = scalar_lea.vmem [#allocation1], 210
    %v762 = vld [vmem:[%s761] sm:$0x40]
    %vm763 = vcmask 1046534
    %v764 = vsel %vm763, %v762, %v760
    %s765 = scalar_lea.vmem [#allocation1], 465
    %v766 = vld [vmem:[%s765] sm:$0x80]
    %vm767 = vcmask 1047559
    %v768 = vsel %vm767, %v766, %v764
    %769 = vrot.lane.b32.xlu0 %v768, 96
    %v770 = vpop.permute.xlu0 %769
    %vm771 = vcmask 917248
    %s772 = scalar_lea.vmem [#allocation0], 32
    %773 = vst.msk [vmem:[%s772] sm:$0x7] %vm771, %v770
    %s774 = scalar_lea.vmem [#allocation0], 37
    %775 = vst.msk [vmem:[%s774] sm:$0x38] %vm771, %v770
    %s776 = scalar_lea.vmem [#allocation0], 42
    %777 = vst.msk [vmem:[%s776] sm:$0xc0] %vm771, %v770
    %s778 = scalar_lea.vmem [#allocation1], 600
    %v779 = vld [vmem:[%s778] sm:$0x1]
    %s780 = scalar_lea.vmem [#allocation1], 119
    %v781 = vld [vmem:[%s780] sm:$0x2]
    %vm782 = vcmask 1041409
    %v783 = vsel %vm782, %v781, %v779
    %s784 = scalar_lea.vmem [#allocation1], 374
    %v785 = vld [vmem:[%s784] sm:$0x4]
    %vm786 = vcmask 1042434
    %v787 = vsel %vm786, %v785, %v783
    %s788 = scalar_lea.vmem [#allocation1], 629
    %v789 = vld [vmem:[%s788] sm:$0x8]
    %vm790 = vcmask 1043459
    %v791 = vsel %vm790, %v789, %v787
    %s792 = scalar_lea.vmem [#allocation1], 724
    %v793 = vld [vmem:[%s792] sm:$0x10]
    %vm794 = vcmask 1044484
    %v795 = vsel %vm794, %v793, %v791
    %s796 = scalar_lea.vmem [#allocation1], 243
    %v797 = vld [vmem:[%s796] sm:$0x20]
    %vm798 = vcmask 1045509
    %v799 = vsel %vm798, %v797, %v795
    %s800 = scalar_lea.vmem [#allocation1], 498
    %v801 = vld [vmem:[%s800] sm:$0x40]
    %vm802 = vcmask 1046534
    %v803 = vsel %vm802, %v801, %v799
    %s804 = scalar_lea.vmem [#allocation1], 753
    %v805 = vld [vmem:[%s804] sm:$0x80]
    %vm806 = vcmask 1047559
    %v807 = vsel %vm806, %v805, %v803
    %808 = vrot.lane.b32.xlu0 %v807, 96
    %v809 = vpop.permute.xlu0 %808
    %vm810 = vcmask 917248
    %s811 = scalar_lea.vmem [#allocation0], 18
    %812 = vst.msk [vmem:[%s811] ss:$6 sm:$0x3] %vm810, %v809
    %s813 = scalar_lea.vmem [#allocation0], 23
    %814 = vst.msk [vmem:[%s813] sm:$0xc] %vm810, %v809
    %s815 = scalar_lea.vmem [#allocation0], 26
    %816 = vst.msk [vmem:[%s815] ss:$6 sm:$0x30] %vm810, %v809
    %s817 = scalar_lea.vmem [#allocation0], 51
    %818 = vst.msk [vmem:[%s817] sm:$0xc0] %vm810, %v809
    %s819 = scalar_lea.vmem [#allocation1], 17
    %v820 = vld [vmem:[%s819] sm:$0x1]
    %s821 = scalar_lea.vmem [#allocation1], 272
    %v822 = vld [vmem:[%s821] sm:$0x2]
    %vm823 = vcmask 1041409
    %v824 = vsel %vm823, %v822, %v820
    %s825 = scalar_lea.vmem [#allocation1], 527
    %v826 = vld [vmem:[%s825] sm:$0x4]
    %vm827 = vcmask 1042434
    %v828 = vsel %vm827, %v826, %v824
    %s829 = scalar_lea.vmem [#allocation1], 46
    %v830 = vld [vmem:[%s829] sm:$0x8]
    %vm831 = vcmask 1043459
    %v832 = vsel %vm831, %v830, %v828
    %s833 = scalar_lea.vmem [#allocation1], 301
    %v834 = vld [vmem:[%s833] sm:$0x10]
    %vm835 = vcmask 1044484
    %v836 = vsel %vm835, %v834, %v832
    %s837 = scalar_lea.vmem [#allocation1], 556
    %v838 = vld [vmem:[%s837] sm:$0x20]
    %vm839 = vcmask 1045509
    %v840 = vsel %vm839, %v838, %v836
    %s841 = scalar_lea.vmem [#allocation1], 75
    %v842 = vld [vmem:[%s841] sm:$0x40]
    %vm843 = vcmask 1046534
    %v844 = vsel %vm843, %v842, %v840
    %s845 = scalar_lea.vmem [#allocation1], 330
    %v846 = vld [vmem:[%s845] sm:$0x80]
    %vm847 = vcmask 1047559
    %v848 = vsel %vm847, %v846, %v844
    %849 = vrot.lane.b32.xlu0 %v848, 80
    %v850 = vpop.permute.xlu0 %849
    %vm851 = vcmask 786048
    %852 = vst.msk [vmem:[#allocation0] sm:$0x7] %vm851, %v850
    %s853 = scalar_lea.vmem [#allocation0], 5
    %854 = vst.msk [vmem:[%s853] sm:$0x38] %vm851, %v850
    %s855 = scalar_lea.vmem [#allocation0], 10
    %856 = vst.msk [vmem:[%s855] sm:$0xc0] %vm851, %v850
    %s857 = scalar_lea.vmem [#allocation1], 145
    %v858 = vld [vmem:[%s857] sm:$0x1]
    %s859 = scalar_lea.vmem [#allocation1], 400
    %v860 = vld [vmem:[%s859] sm:$0x2]
    %vm861 = vcmask 1041409
    %v862 = vsel %vm861, %v860, %v858
    %s863 = scalar_lea.vmem [#allocation1], 655
    %v864 = vld [vmem:[%s863] sm:$0x4]
    %vm865 = vcmask 1042434
    %v866 = vsel %vm865, %v864, %v862
    %s867 = scalar_lea.vmem [#allocation1], 174
    %v868 = vld [vmem:[%s867] sm:$0x8]
    %vm869 = vcmask 1043459
    %v870 = vsel %vm869, %v868, %v866
    %s871 = scalar_lea.vmem [#allocation1], 429
    %v872 = vld [vmem:[%s871] sm:$0x10]
    %vm873 = vcmask 1044484
    %v874 = vsel %vm873, %v872, %v870
    %s875 = scalar_lea.vmem [#allocation1], 684
    %v876 = vld [vmem:[%s875] sm:$0x20]
    %vm877 = vcmask 1045509
    %v878 = vsel %vm877, %v876, %v874
    %s879 = scalar_lea.vmem [#allocation1], 203
    %v880 = vld [vmem:[%s879] sm:$0x40]
    %vm881 = vcmask 1046534
    %v882 = vsel %vm881, %v880, %v878
    %s883 = scalar_lea.vmem [#allocation1], 458
    %v884 = vld [vmem:[%s883] sm:$0x80]
    %vm885 = vcmask 1047559
    %v886 = vsel %vm885, %v884, %v882
    %887 = vrot.lane.b32.xlu0 %v886, 80
    %v888 = vpop.permute.xlu0 %887
    %vm889 = vcmask 786048
    %s890 = scalar_lea.vmem [#allocation0], 32
    %891 = vst.msk [vmem:[%s890] sm:$0x7] %vm889, %v888
    %s892 = scalar_lea.vmem [#allocation0], 37
    %893 = vst.msk [vmem:[%s892] sm:$0x38] %vm889, %v888
    %s894 = scalar_lea.vmem [#allocation0], 42
    %895 = vst.msk [vmem:[%s894] sm:$0xc0] %vm889, %v888
    %s896 = scalar_lea.vmem [#allocation1], 593
    %v897 = vld [vmem:[%s896] sm:$0x1]
    %s898 = scalar_lea.vmem [#allocation1], 112
    %v899 = vld [vmem:[%s898] sm:$0x2]
    %vm900 = vcmask 1041409
    %v901 = vsel %vm900, %v899, %v897
    %s902 = scalar_lea.vmem [#allocation1], 367
    %v903 = vld [vmem:[%s902] sm:$0x4]
    %vm904 = vcmask 1042434
    %v905 = vsel %vm904, %v903, %v901
    %s906 = scalar_lea.vmem [#allocation1], 622
    %v907 = vld [vmem:[%s906] sm:$0x8]
    %vm908 = vcmask 1043459
    %v909 = vsel %vm908, %v907, %v905
    %s910 = scalar_lea.vmem [#allocation1], 717
    %v911 = vld [vmem:[%s910] sm:$0x10]
    %vm912 = vcmask 1044484
    %v913 = vsel %vm912, %v911, %v909
    %s914 = scalar_lea.vmem [#allocation1], 236
    %v915 = vld [vmem:[%s914] sm:$0x20]
    %vm916 = vcmask 1045509
    %v917 = vsel %vm916, %v915, %v913
    %s918 = scalar_lea.vmem [#allocation1], 491
    %v919 = vld [vmem:[%s918] sm:$0x40]
    %vm920 = vcmask 1046534
    %v921 = vsel %vm920, %v919, %v917
    %s922 = scalar_lea.vmem [#allocation1], 746
    %v923 = vld [vmem:[%s922] sm:$0x80]
    %vm924 = vcmask 1047559
    %v925 = vsel %vm924, %v923, %v921
    %926 = vrot.lane.b32.xlu0 %v925, 80
    %v927 = vpop.permute.xlu0 %926
    %vm928 = vcmask 786048
    %s929 = scalar_lea.vmem [#allocation0], 18
    %930 = vst.msk [vmem:[%s929] ss:$6 sm:$0x3] %vm928, %v927
    %s931 = scalar_lea.vmem [#allocation0], 23
    %932 = vst.msk [vmem:[%s931] sm:$0xc] %vm928, %v927
    %s933 = scalar_lea.vmem [#allocation0], 26
    %934 = vst.msk [vmem:[%s933] ss:$6 sm:$0x30] %vm928, %v927
    %s935 = scalar_lea.vmem [#allocation0], 51
    %936 = vst.msk [vmem:[%s935] sm:$0xc0] %vm928, %v927
    %s937 = scalar_lea.vmem [#allocation1], 16
    %v938 = vld [vmem:[%s937] sm:$0x1]
    %s939 = scalar_lea.vmem [#allocation1], 271
    %v940 = vld [vmem:[%s939] sm:$0x2]
    %vm941 = vcmask 1041409
    %v942 = vsel %vm941, %v940, %v938
    %s943 = scalar_lea.vmem [#allocation1], 526
    %v944 = vld [vmem:[%s943] sm:$0x4]
    %vm945 = vcmask 1042434
    %v946 = vsel %vm945, %v944, %v942
    %s947 = scalar_lea.vmem [#allocation1], 45
    %v948 = vld [vmem:[%s947] sm:$0x8]
    %vm949 = vcmask 1043459
    %v950 = vsel %vm949, %v948, %v946
    %s951 = scalar_lea.vmem [#allocation1], 300
    %v952 = vld [vmem:[%s951] sm:$0x10]
    %vm953 = vcmask 1044484
    %v954 = vsel %vm953, %v952, %v950
    %s955 = scalar_lea.vmem [#allocation1], 555
    %v956 = vld [vmem:[%s955] sm:$0x20]
    %vm957 = vcmask 1045509
    %v958 = vsel %vm957, %v956, %v954
    %s959 = scalar_lea.vmem [#allocation1], 74
    %v960 = vld [vmem:[%s959] sm:$0x40]
    %vm961 = vcmask 1046534
    %v962 = vsel %vm961, %v960, %v958
    %s963 = scalar_lea.vmem [#allocation1], 329
    %v964 = vld [vmem:[%s963] sm:$0x80]
    %vm965 = vcmask 1047559
    %v966 = vsel %vm965, %v964, %v962
    %967 = vrot.lane.b32.xlu0 %v966, 64
    %v968 = vpop.permute.xlu0 %967
    %vm969 = vcmask 654848
    %970 = vst.msk [vmem:[#allocation0] sm:$0x7] %vm969, %v968
    %s971 = scalar_lea.vmem [#allocation0], 5
    %972 = vst.msk [vmem:[%s971] sm:$0x38] %vm969, %v968
    %s973 = scalar_lea.vmem [#allocation0], 10
    %974 = vst.msk [vmem:[%s973] sm:$0xc0] %vm969, %v968
    %s975 = scalar_lea.vmem [#allocation1], 144
    %v976 = vld [vmem:[%s975] sm:$0x1]
    %s977 = scalar_lea.vmem [#allocation1], 399
    %v978 = vld [vmem:[%s977] sm:$0x2]
    %vm979 = vcmask 1041409
    %v980 = vsel %vm979, %v978, %v976
    %s981 = scalar_lea.vmem [#allocation1], 654
    %v982 = vld [vmem:[%s981] sm:$0x4]
    %vm983 = vcmask 1042434
    %v984 = vsel %vm983, %v982, %v980
    %s985 = scalar_lea.vmem [#allocation1], 173
    %v986 = vld [vmem:[%s985] sm:$0x8]
    %vm987 = vcmask 1043459
    %v988 = vsel %vm987, %v986, %v984
    %s989 = scalar_lea.vmem [#allocation1], 428
    %v990 = vld [vmem:[%s989] sm:$0x10]
    %vm991 = vcmask 1044484
    %v992 = vsel %vm991, %v990, %v988
    %s993 = scalar_lea.vmem [#allocation1], 683
    %v994 = vld [vmem:[%s993] sm:$0x20]
    %vm995 = vcmask 1045509
    %v996 = vsel %vm995, %v994, %v992
    %s997 = scalar_lea.vmem [#allocation1], 202
    %v998 = vld [vmem:[%s997] sm:$0x40]
    %vm999 = vcmask 1046534
    %v1000 = vsel %vm999, %v998, %v996
    %s1001 = scalar_lea.vmem [#allocation1], 457
    %v1002 = vld [vmem:[%s1001] sm:$0x80]
    %vm1003 = vcmask 1047559
    %v1004 = vsel %vm1003, %v1002, %v1000
    %1005 = vrot.lane.b32.xlu0 %v1004, 64
    %v1006 = vpop.permute.xlu0 %1005
    %vm1007 = vcmask 654848
    %s1008 = scalar_lea.vmem [#allocation0], 32
    %1009 = vst.msk [vmem:[%s1008] sm:$0x7] %vm1007, %v1006
    %s1010 = scalar_lea.vmem [#allocation0], 37
    %1011 = vst.msk [vmem:[%s1010] sm:$0x38] %vm1007, %v1006
    %s1012 = scalar_lea.vmem [#allocation0], 42
    %1013 = vst.msk [vmem:[%s1012] sm:$0xc0] %vm1007, %v1006
    %s1014 = scalar_lea.vmem [#allocation1], 592
    %v1015 = vld [vmem:[%s1014] sm:$0x1]
    %s1016 = scalar_lea.vmem [#allocation1], 111
    %v1017 = vld [vmem:[%s1016] sm:$0x2]
    %vm1018 = vcmask 1041409
    %v1019 = vsel %vm1018, %v1017, %v1015
    %s1020 = scalar_lea.vmem [#allocation1], 366
    %v1021 = vld [vmem:[%s1020] sm:$0x4]
    %vm1022 = vcmask 1042434
    %v1023 = vsel %vm1022, %v1021, %v1019
    %s1024 = scalar_lea.vmem [#allocation1], 621
    %v1025 = vld [vmem:[%s1024] sm:$0x8]
    %vm1026 = vcmask 1043459
    %v1027 = vsel %vm1026, %v1025, %v1023
    %s1028 = scalar_lea.vmem [#allocation1], 716
    %v1029 = vld [vmem:[%s1028] sm:$0x10]
    %vm1030 = vcmask 1044484
    %v1031 = vsel %vm1030, %v1029, %v1027
    %s1032 = scalar_lea.vmem [#allocation1], 235
    %v1033 = vld [vmem:[%s1032] sm:$0x20]
    %vm1034 = vcmask 1045509
    %v1035 = vsel %vm1034, %v1033, %v1031
    %s1036 = scalar_lea.vmem [#allocation1], 490
    %v1037 = vld [vmem:[%s1036] sm:$0x40]
    %vm1038 = vcmask 1046534
    %v1039 = vsel %vm1038, %v1037, %v1035
    %s1040 = scalar_lea.vmem [#allocation1], 745
    %v1041 = vld [vmem:[%s1040] sm:$0x80]
    %vm1042 = vcmask 1047559
    %v1043 = vsel %vm1042, %v1041, %v1039
    %1044 = vrot.lane.b32.xlu0 %v1043, 64
    %v1045 = vpop.permute.xlu0 %1044
    %vm1046 = vcmask 654848
    %s1047 = scalar_lea.vmem [#allocation0], 18
    %1048 = vst.msk [vmem:[%s1047] ss:$6 sm:$0x3] %vm1046, %v1045
    %s1049 = scalar_lea.vmem [#allocation0], 23
    %1050 = vst.msk [vmem:[%s1049] sm:$0xc] %vm1046, %v1045
    %s1051 = scalar_lea.vmem [#allocation0], 26
    %1052 = vst.msk [vmem:[%s1051] ss:$6 sm:$0x30] %vm1046, %v1045
    %s1053 = scalar_lea.vmem [#allocation0], 51
    %1054 = vst.msk [vmem:[%s1053] sm:$0xc0] %vm1046, %v1045
    %s1055 = scalar_lea.vmem [#allocation1], 9
    %v1056 = vld [vmem:[%s1055] sm:$0x1]
    %s1057 = scalar_lea.vmem [#allocation1], 264
    %v1058 = vld [vmem:[%s1057] sm:$0x2]
    %vm1059 = vcmask 1041409
    %v1060 = vsel %vm1059, %v1058, %v1056
    %s1061 = scalar_lea.vmem [#allocation1], 519
    %v1062 = vld [vmem:[%s1061] sm:$0x4]
    %vm1063 = vcmask 1042434
    %v1064 = vsel %vm1063, %v1062, %v1060
    %s1065 = scalar_lea.vmem [#allocation1], 38
    %v1066 = vld [vmem:[%s1065] sm:$0x8]
    %vm1067 = vcmask 1043459
    %v1068 = vsel %vm1067, %v1066, %v1064
    %s1069 = scalar_lea.vmem [#allocation1], 293
    %v1070 = vld [vmem:[%s1069] sm:$0x10]
    %vm1071 = vcmask 1044484
    %v1072 = vsel %vm1071, %v1070, %v1068
    %s1073 = scalar_lea.vmem [#allocation1], 548
    %v1074 = vld [vmem:[%s1073] sm:$0x20]
    %vm1075 = vcmask 1045509
    %v1076 = vsel %vm1075, %v1074, %v1072
    %s1077 = scalar_lea.vmem [#allocation1], 67
    %v1078 = vld [vmem:[%s1077] sm:$0x40]
    %vm1079 = vcmask 1046534
    %v1080 = vsel %vm1079, %v1078, %v1076
    %s1081 = scalar_lea.vmem [#allocation1], 322
    %v1082 = vld [vmem:[%s1081] sm:$0x80]
    %vm1083 = vcmask 1047559
    %v1084 = vsel %vm1083, %v1082, %v1080
    %1085 = vrot.lane.b32.xlu0 %v1084, 48
    %v1086 = vpop.permute.xlu0 %1085
    %vm1087 = vcmask 523648
    %1088 = vst.msk [vmem:[#allocation0] sm:$0x7] %vm1087, %v1086
    %s1089 = scalar_lea.vmem [#allocation0], 5
    %1090 = vst.msk [vmem:[%s1089] sm:$0x38] %vm1087, %v1086
    %s1091 = scalar_lea.vmem [#allocation0], 10
    %1092 = vst.msk [vmem:[%s1091] sm:$0xc0] %vm1087, %v1086
    %s1093 = scalar_lea.vmem [#allocation1], 137
    %v1094 = vld [vmem:[%s1093] sm:$0x1]
    %s1095 = scalar_lea.vmem [#allocation1], 392
    %v1096 = vld [vmem:[%s1095] sm:$0x2]
    %vm1097 = vcmask 1041409
    %v1098 = vsel %vm1097, %v1096, %v1094
    %s1099 = scalar_lea.vmem [#allocation1], 647
    %v1100 = vld [vmem:[%s1099] sm:$0x4]
    %vm1101 = vcmask 1042434
    %v1102 = vsel %vm1101, %v1100, %v1098
    %s1103 = scalar_lea.vmem [#allocation1], 166
    %v1104 = vld [vmem:[%s1103] sm:$0x8]
    %vm1105 = vcmask 1043459
    %v1106 = vsel %vm1105, %v1104, %v1102
    %s1107 = scalar_lea.vmem [#allocation1], 421
    %v1108 = vld [vmem:[%s1107] sm:$0x10]
    %vm1109 = vcmask 1044484
    %v1110 = vsel %vm1109, %v1108, %v1106
    %s1111 = scalar_lea.vmem [#allocation1], 676
    %v1112 = vld [vmem:[%s1111] sm:$0x20]
    %vm1113 = vcmask 1045509
    %v1114 = vsel %vm1113, %v1112, %v1110
    %s1115 = scalar_lea.vmem [#allocation1], 195
    %v1116 = vld [vmem:[%s1115] sm:$0x40]
    %vm1117 = vcmask 1046534
    %v1118 = vsel %vm1117, %v1116, %v1114
    %s1119 = scalar_lea.vmem [#allocation1], 450
    %v1120 = vld [vmem:[%s1119] sm:$0x80]
    %vm1121 = vcmask 1047559
    %v1122 = vsel %vm1121, %v1120, %v1118
    %1123 = vrot.lane.b32.xlu0 %v1122, 48
    %v1124 = vpop.permute.xlu0 %1123
    %vm1125 = vcmask 523648
    %s1126 = scalar_lea.vmem [#allocation0], 32
    %1127 = vst.msk [vmem:[%s1126] sm:$0x7] %vm1125, %v1124
    %s1128 = scalar_lea.vmem [#allocation0], 37
    %1129 = vst.msk [vmem:[%s1128] sm:$0x38] %vm1125, %v1124
    %s1130 = scalar_lea.vmem [#allocation0], 42
    %1131 = vst.msk [vmem:[%s1130] sm:$0xc0] %vm1125, %v1124
    %s1132 = scalar_lea.vmem [#allocation1], 585
    %v1133 = vld [vmem:[%s1132] sm:$0x1]
    %s1134 = scalar_lea.vmem [#allocation1], 104
    %v1135 = vld [vmem:[%s1134] sm:$0x2]
    %vm1136 = vcmask 1041409
    %v1137 = vsel %vm1136, %v1135, %v1133
    %s1138 = scalar_lea.vmem [#allocation1], 359
    %v1139 = vld [vmem:[%s1138] sm:$0x4]
    %vm1140 = vcmask 1042434
    %v1141 = vsel %vm1140, %v1139, %v1137
    %s1142 = scalar_lea.vmem [#allocation1], 614
    %v1143 = vld [vmem:[%s1142] sm:$0x8]
    %vm1144 = vcmask 1043459
    %v1145 = vsel %vm1144, %v1143, %v1141
    %s1146 = scalar_lea.vmem [#allocation1], 709
    %v1147 = vld [vmem:[%s1146] sm:$0x10]
    %vm1148 = vcmask 1044484
    %v1149 = vsel %vm1148, %v1147, %v1145
    %s1150 = scalar_lea.vmem [#allocation1], 228
    %v1151 = vld [vmem:[%s1150] sm:$0x20]
    %vm1152 = vcmask 1045509
    %v1153 = vsel %vm1152, %v1151, %v1149
    %s1154 = scalar_lea.vmem [#allocation1], 483
    %v1155 = vld [vmem:[%s1154] sm:$0x40]
    %vm1156 = vcmask 1046534
    %v1157 = vsel %vm1156, %v1155, %v1153
    %s1158 = scalar_lea.vmem [#allocation1], 738
    %v1159 = vld [vmem:[%s1158] sm:$0x80]
    %vm1160 = vcmask 1047559
    %v1161 = vsel %vm1160, %v1159, %v1157
    %1162 = vrot.lane.b32.xlu0 %v1161, 48
    %v1163 = vpop.permute.xlu0 %1162
    %vm1164 = vcmask 523648
    %s1165 = scalar_lea.vmem [#allocation0], 18
    %1166 = vst.msk [vmem:[%s1165] ss:$6 sm:$0x3] %vm1164, %v1163
    %s1167 = scalar_lea.vmem [#allocation0], 23
    %1168 = vst.msk [vmem:[%s1167] sm:$0xc] %vm1164, %v1163
    %s1169 = scalar_lea.vmem [#allocation0], 26
    %1170 = vst.msk [vmem:[%s1169] ss:$6 sm:$0x30] %vm1164, %v1163
    %s1171 = scalar_lea.vmem [#allocation0], 51
    %1172 = vst.msk [vmem:[%s1171] sm:$0xc0] %vm1164, %v1163
    %s1173 = scalar_lea.vmem [#allocation1], 8
    %v1174 = vld [vmem:[%s1173] sm:$0x1]
    %s1175 = scalar_lea.vmem [#allocation1], 263
    %v1176 = vld [vmem:[%s1175] sm:$0x2]
    %vm1177 = vcmask 1041409
    %v1178 = vsel %vm1177, %v1176, %v1174
    %s1179 = scalar_lea.vmem [#allocation1], 518
    %v1180 = vld [vmem:[%s1179] sm:$0x4]
    %vm1181 = vcmask 1042434
    %v1182 = vsel %vm1181, %v1180, %v1178
    %s1183 = scalar_lea.vmem [#allocation1], 37
    %v1184 = vld [vmem:[%s1183] sm:$0x8]
    %vm1185 = vcmask 1043459
    %v1186 = vsel %vm1185, %v1184, %v1182
    %s1187 = scalar_lea.vmem [#allocation1], 292
    %v1188 = vld [vmem:[%s1187] sm:$0x10]
    %vm1189 = vcmask 1044484
    %v1190 = vsel %vm1189, %v1188, %v1186
    %s1191 = scalar_lea.vmem [#allocation1], 547
    %v1192 = vld [vmem:[%s1191] sm:$0x20]
    %vm1193 = vcmask 1045509
    %v1194 = vsel %vm1193, %v1192, %v1190
    %s1195 = scalar_lea.vmem [#allocation1], 66
    %v1196 = vld [vmem:[%s1195] sm:$0x40]
    %vm1197 = vcmask 1046534
    %v1198 = vsel %vm1197, %v1196, %v1194
    %s1199 = scalar_lea.vmem [#allocation1], 321
    %v1200 = vld [vmem:[%s1199] sm:$0x80]
    %vm1201 = vcmask 1047559
    %v1202 = vsel %vm1201, %v1200, %v1198
    %1203 = vrot.lane.b32.xlu0 %v1202, 32
    %v1204 = vpop.permute.xlu0 %1203
    %vm1205 = vcmask 392448
    %1206 = vst.msk [vmem:[#allocation0] sm:$0x7] %vm1205, %v1204
    %s1207 = scalar_lea.vmem [#allocation0], 5
    %1208 = vst.msk [vmem:[%s1207] sm:$0x38] %vm1205, %v1204
    %s1209 = scalar_lea.vmem [#allocation0], 10
    %1210 = vst.msk [vmem:[%s1209] sm:$0xc0] %vm1205, %v1204
    %s1211 = scalar_lea.vmem [#allocation1], 136
    %v1212 = vld [vmem:[%s1211] sm:$0x1]
    %s1213 = scalar_lea.vmem [#allocation1], 391
    %v1214 = vld [vmem:[%s1213] sm:$0x2]
    %vm1215 = vcmask 1041409
    %v1216 = vsel %vm1215, %v1214, %v1212
    %s1217 = scalar_lea.vmem [#allocation1], 646
    %v1218 = vld [vmem:[%s1217] sm:$0x4]
    %vm1219 = vcmask 1042434
    %v1220 = vsel %vm1219, %v1218, %v1216
    %s1221 = scalar_lea.vmem [#allocation1], 165
    %v1222 = vld [vmem:[%s1221] sm:$0x8]
    %vm1223 = vcmask 1043459
    %v1224 = vsel %vm1223, %v1222, %v1220
    %s1225 = scalar_lea.vmem [#allocation1], 420
    %v1226 = vld [vmem:[%s1225] sm:$0x10]
    %vm1227 = vcmask 1044484
    %v1228 = vsel %vm1227, %v1226, %v1224
    %s1229 = scalar_lea.vmem [#allocation1], 675
    %v1230 = vld [vmem:[%s1229] sm:$0x20]
    %vm1231 = vcmask 1045509
    %v1232 = vsel %vm1231, %v1230, %v1228
    %s1233 = scalar_lea.vmem [#allocation1], 194
    %v1234 = vld [vmem:[%s1233] sm:$0x40]
    %vm1235 = vcmask 1046534
    %v1236 = vsel %vm1235, %v1234, %v1232
    %s1237 = scalar_lea.vmem [#allocation1], 449
    %v1238 = vld [vmem:[%s1237] sm:$0x80]
    %vm1239 = vcmask 1047559
    %v1240 = vsel %vm1239, %v1238, %v1236
    %1241 = vrot.lane.b32.xlu0 %v1240, 32
    %v1242 = vpop.permute.xlu0 %1241
    %vm1243 = vcmask 392448
    %s1244 = scalar_lea.vmem [#allocation0], 32
    %1245 = vst.msk [vmem:[%s1244] sm:$0x7] %vm1243, %v1242
    %s1246 = scalar_lea.vmem [#allocation0], 37
    %1247 = vst.msk [vmem:[%s1246] sm:$0x38] %vm1243, %v1242
    %s1248 = scalar_lea.vmem [#allocation0], 42
    %1249 = vst.msk [vmem:[%s1248] sm:$0xc0] %vm1243, %v1242
    %s1250 = scalar_lea.vmem [#allocation1], 584
    %v1251 = vld [vmem:[%s1250] sm:$0x1]
    %s1252 = scalar_lea.vmem [#allocation1], 103
    %v1253 = vld [vmem:[%s1252] sm:$0x2]
    %vm1254 = vcmask 1041409
    %v1255 = vsel %vm1254, %v1253, %v1251
    %s1256 = scalar_lea.vmem [#allocation1], 358
    %v1257 = vld [vmem:[%s1256] sm:$0x4]
    %vm1258 = vcmask 1042434
    %v1259 = vsel %vm1258, %v1257, %v1255
    %s1260 = scalar_lea.vmem [#allocation1], 613
    %v1261 = vld [vmem:[%s1260] sm:$0x8]
    %vm1262 = vcmask 1043459
    %v1263 = vsel %vm1262, %v1261, %v1259
    %s1264 = scalar_lea.vmem [#allocation1], 708
    %v1265 = vld [vmem:[%s1264] sm:$0x10]
    %vm1266 = vcmask 1044484
    %v1267 = vsel %vm1266, %v1265, %v1263
    %s1268 = scalar_lea.vmem [#allocation1], 227
    %v1269 = vld [vmem:[%s1268] sm:$0x20]
    %vm1270 = vcmask 1045509
    %v1271 = vsel %vm1270, %v1269, %v1267
    %s1272 = scalar_lea.vmem [#allocation1], 482
    %v1273 = vld [vmem:[%s1272] sm:$0x40]
    %vm1274 = vcmask 1046534
    %v1275 = vsel %vm1274, %v1273, %v1271
    %s1276 = scalar_lea.vmem [#allocation1], 737
    %v1277 = vld [vmem:[%s1276] sm:$0x80]
    %vm1278 = vcmask 1047559
    %v1279 = vsel %vm1278, %v1277, %v1275
    %1280 = vrot.lane.b32.xlu0 %v1279, 32
    %v1281 = vpop.permute.xlu0 %1280
    %vm1282 = vcmask 392448
    %s1283 = scalar_lea.vmem [#allocation0], 18
    %1284 = vst.msk [vmem:[%s1283] ss:$6 sm:$0x3] %vm1282, %v1281
    %s1285 = scalar_lea.vmem [#allocation0], 23
    %1286 = vst.msk [vmem:[%s1285] sm:$0xc] %vm1282, %v1281
    %s1287 = scalar_lea.vmem [#allocation0], 26
    %1288 = vst.msk [vmem:[%s1287] ss:$6 sm:$0x30] %vm1282, %v1281
    %s1289 = scalar_lea.vmem [#allocation0], 51
    %1290 = vst.msk [vmem:[%s1289] sm:$0xc0] %vm1282, %v1281
    %s1291 = scalar_lea.vmem [#allocation1], 1
    %v1292 = vld [vmem:[%s1291] sm:$0x1]
    %s1293 = scalar_lea.vmem [#allocation1], 256
    %v1294 = vld [vmem:[%s1293] sm:$0x2]
    %vm1295 = vcmask 1041409
    %v1296 = vsel %vm1295, %v1294, %v1292
    %s1297 = scalar_lea.vmem [#allocation1], 511
    %v1298 = vld [vmem:[%s1297] sm:$0x4]
    %vm1299 = vcmask 1042434
    %v1300 = vsel %vm1299, %v1298, %v1296
    %s1301 = scalar_lea.vmem [#allocation1], 30
    %v1302 = vld [vmem:[%s1301] sm:$0x8]
    %vm1303 = vcmask 1043459
    %v1304 = vsel %vm1303, %v1302, %v1300
    %s1305 = scalar_lea.vmem [#allocation1], 285
    %v1306 = vld [vmem:[%s1305] sm:$0x10]
    %vm1307 = vcmask 1044484
    %v1308 = vsel %vm1307, %v1306, %v1304
    %s1309 = scalar_lea.vmem [#allocation1], 540
    %v1310 = vld [vmem:[%s1309] sm:$0x20]
    %vm1311 = vcmask 1045509
    %v1312 = vsel %vm1311, %v1310, %v1308
    %s1313 = scalar_lea.vmem [#allocation1], 59
    %v1314 = vld [vmem:[%s1313] sm:$0x40]
    %vm1315 = vcmask 1046534
    %v1316 = vsel %vm1315, %v1314, %v1312
    %s1317 = scalar_lea.vmem [#allocation1], 314
    %v1318 = vld [vmem:[%s1317] sm:$0x80]
    %vm1319 = vcmask 1047559
    %v1320 = vsel %vm1319, %v1318, %v1316
    %1321 = vrot.lane.b32.xlu0 %v1320, 16
    %v1322 = vpop.permute.xlu0 %1321
    %vm1323 = vcmask 261248
    %1324 = vst.msk [vmem:[#allocation0] sm:$0x7] %vm1323, %v1322
    %s1325 = scalar_lea.vmem [#allocation0], 5
    %1326 = vst.msk [vmem:[%s1325] sm:$0x38] %vm1323, %v1322
    %s1327 = scalar_lea.vmem [#allocation0], 10
    %1328 = vst.msk [vmem:[%s1327] sm:$0xc0] %vm1323, %v1322
    %s1329 = scalar_lea.vmem [#allocation1], 129
    %v1330 = vld [vmem:[%s1329] sm:$0x1]
    %s1331 = scalar_lea.vmem [#allocation1], 384
    %v1332 = vld [vmem:[%s1331] sm:$0x2]
    %vm1333 = vcmask 1041409
    %v1334 = vsel %vm1333, %v1332, %v1330
    %s1335 = scalar_lea.vmem [#allocation1], 639
    %v1336 = vld [vmem:[%s1335] sm:$0x4]
    %vm1337 = vcmask 1042434
    %v1338 = vsel %vm1337, %v1336, %v1334
    %s1339 = scalar_lea.vmem [#allocation1], 158
    %v1340 = vld [vmem:[%s1339] sm:$0x8]
    %vm1341 = vcmask 1043459
    %v1342 = vsel %vm1341, %v1340, %v1338
    %s1343 = scalar_lea.vmem [#allocation1], 413
    %v1344 = vld [vmem:[%s1343] sm:$0x10]
    %vm1345 = vcmask 1044484
    %v1346 = vsel %vm1345, %v1344, %v1342
    %s1347 = scalar_lea.vmem [#allocation1], 668
    %v1348 = vld [vmem:[%s1347] sm:$0x20]
    %vm1349 = vcmask 1045509
    %v1350 = vsel %vm1349, %v1348, %v1346
    %s1351 = scalar_lea.vmem [#allocation1], 187
    %v1352 = vld [vmem:[%s1351] sm:$0x40]
    %vm1353 = vcmask 1046534
    %v1354 = vsel %vm1353, %v1352, %v1350
    %s1355 = scalar_lea.vmem [#allocation1], 442
    %v1356 = vld [vmem:[%s1355] sm:$0x80]
    %vm1357 = vcmask 1047559
    %v1358 = vsel %vm1357, %v1356, %v1354
    %1359 = vrot.lane.b32.xlu0 %v1358, 16
    %v1360 = vpop.permute.xlu0 %1359
    %vm1361 = vcmask 261248
    %s1362 = scalar_lea.vmem [#allocation0], 32
    %1363 = vst.msk [vmem:[%s1362] sm:$0x7] %vm1361, %v1360
    %s1364 = scalar_lea.vmem [#allocation0], 37
    %1365 = vst.msk [vmem:[%s1364] sm:$0x38] %vm1361, %v1360
    %s1366 = scalar_lea.vmem [#allocation0], 42
    %1367 = vst.msk [vmem:[%s1366] sm:$0xc0] %vm1361, %v1360
    %s1368 = scalar_lea.vmem [#allocation1], 577
    %v1369 = vld [vmem:[%s1368] sm:$0x1]
    %s1370 = scalar_lea.vmem [#allocation1], 96
    %v1371 = vld [vmem:[%s1370] sm:$0x2]
    %vm1372 = vcmask 1041409
    %v1373 = vsel %vm1372, %v1371, %v1369
    %s1374 = scalar_lea.vmem [#allocation1], 351
    %v1375 = vld [vmem:[%s1374] sm:$0x4]
    %vm1376 = vcmask 1042434
    %v1377 = vsel %vm1376, %v1375, %v1373
    %s1378 = scalar_lea.vmem [#allocation1], 606
    %v1379 = vld [vmem:[%s1378] sm:$0x8]
    %vm1380 = vcmask 1043459
    %v1381 = vsel %vm1380, %v1379, %v1377
    %s1382 = scalar_lea.vmem [#allocation1], 701
    %v1383 = vld [vmem:[%s1382] sm:$0x10]
    %vm1384 = vcmask 1044484
    %v1385 = vsel %vm1384, %v1383, %v1381
    %s1386 = scalar_lea.vmem [#allocation1], 220
    %v1387 = vld [vmem:[%s1386] sm:$0x20]
    %vm1388 = vcmask 1045509
    %v1389 = vsel %vm1388, %v1387, %v1385
    %s1390 = scalar_lea.vmem [#allocation1], 475
    %v1391 = vld [vmem:[%s1390] sm:$0x40]
    %vm1392 = vcmask 1046534
    %v1393 = vsel %vm1392, %v1391, %v1389
    %s1394 = scalar_lea.vmem [#allocation1], 730
    %v1395 = vld [vmem:[%s1394] sm:$0x80]
    %vm1396 = vcmask 1047559
    %v1397 = vsel %vm1396, %v1395, %v1393
    %1398 = vrot.lane.b32.xlu0 %v1397, 16
    %v1399 = vpop.permute.xlu0 %1398
    %vm1400 = vcmask 261248
    %s1401 = scalar_lea.vmem [#allocation0], 18
    %1402 = vst.msk [vmem:[%s1401] ss:$6 sm:$0x3] %vm1400, %v1399
    %s1403 = scalar_lea.vmem [#allocation0], 23
    %1404 = vst.msk [vmem:[%s1403] sm:$0xc] %vm1400, %v1399
    %s1405 = scalar_lea.vmem [#allocation0], 26
    %1406 = vst.msk [vmem:[%s1405] ss:$6 sm:$0x30] %vm1400, %v1399
    %s1407 = scalar_lea.vmem [#allocation0], 51
    %1408 = vst.msk [vmem:[%s1407] sm:$0xc0] %vm1400, %v1399
    %s1410 = sshll.u32 1, 4
    %s1411 = ssub.s32 %s1410, 1
    %v1413 = vld [vmem:[#allocation0] sm:%s1411]
    %s1414 = sshll.u32 1, 4
    %s1415 = ssub.s32 %s1414, 1
    %1416 = vst [vmem:[%s1] sm:%s1415] %v1413
    %s1417 = scalar_lea.vmem [#allocation0], 8
    %v1418 = vld [vmem:[%s1417] sm:%s1411]
    %s1419 = sshll.u32 1, 4
    %s1420 = ssub.s32 %s1419, 1
    %s1421 = scalar_lea.vmem %s1, 4
    %1422 = vst [vmem:[%s1421] sm:%s1420] %v1418
    %s1423 = scalar_lea.vmem [#allocation0], 16
    %v1424 = vld [vmem:[%s1423] sm:%s1411]
    %s1425 = sshll.u32 1, 4
    %s1426 = ssub.s32 %s1425, 1
    %s1427 = smul.addr 4, 2
    %s1428 = scalar_lea.vmem %s1, %s1427
    %1429 = vst [vmem:[%s1428] sm:%s1426] %v1424
    %s1430 = scalar_lea.vmem [#allocation0], 24
    %v1431 = vld [vmem:[%s1430] sm:%s1411]
    %s1432 = sshll.u32 1, 4
    %s1433 = ssub.s32 %s1432, 1
    %s1434 = smul.addr 4, 3
    %s1435 = scalar_lea.vmem %s1, %s1434
    %1436 = vst [vmem:[%s1435] sm:%s1433] %v1431
    %s1437 = scalar_lea.vmem [#allocation0], 32
    %v1438 = vld [vmem:[%s1437] sm:%s1411]
    %s1439 = sshll.u32 1, 4
    %s1440 = ssub.s32 %s1439, 1
    %s1441 = smul.addr 4, 4
    %s1442 = scalar_lea.vmem %s1, %s1441
    %1443 = vst [vmem:[%s1442] sm:%s1440] %v1438
    %s1444 = scalar_lea.vmem [#allocation0], 40
    %v1445 = vld [vmem:[%s1444] sm:%s1411]
    %s1446 = sshll.u32 1, 4
    %s1447 = ssub.s32 %s1446, 1
    %s1448 = smul.addr 4, 5
    %s1449 = scalar_lea.vmem %s1, %s1448
    %1450 = vst [vmem:[%s1449] sm:%s1447] %v1445
    %s1451 = scalar_lea.vmem [#allocation0], 48
    %v1452 = vld [vmem:[%s1451] sm:%s1411]
    %s1453 = sshll.u32 1, 4
    %s1454 = ssub.s32 %s1453, 1
    %s1455 = smul.addr 4, 6
    %s1456 = scalar_lea.vmem %s1, %s1455
    %1457 = vst [vmem:[%s1456] sm:%s1454] %v1452
    %s1458 = scalar_lea.vmem [#allocation0], 56
    %v1459 = vld [vmem:[%s1458] sm:%s1411]
    %s1460 = sshll.u32 1, 4
    %s1461 = ssub.s32 %s1460, 1
    %s1462 = smul.addr 4, 7
    %s1463 = scalar_lea.vmem %s1, %s1462
    %1464 = vst [vmem:[%s1463] sm:%s1461] %v1459

// kernel: _shared_prompter_impl.1
$region0: #{_shared_prompter_impl.1}
  #allocation0 [shape = 'u32[]', space=smem, size = 0x4, offset = 0x4, fixed_abs, tag = 'smem constant byte address 0x4 - core index']
  #allocation1 [shape = 'u32[144,128]{1,0:T(1,128)}', space=vmem, size = 0x12000, scoped, tag = 'internal scratch']
  %s0 = inlined_call_operand.vmem [shape: f32[2,3,1024], index: 0, kind: input, shape index: {}]
  %s1 = inlined_call_operand.vmem [shape: f32[3,1024], index: 1, kind: input, shape index: {}]
  %s2 = inlined_call_operand.vmem [shape: f32[2,3,1024], index: 2, kind: output, shape index: {}]
  %s3 = sld [smem:[#allocation0]]
  $region41: #{_shared_prompter_impl.1} parent=0
    _
  %s5 = ssub.s32 1, %s3
  %s6 = scalar_select 0, %s5, %s3
  loop: start=0, step=1, limit=4
  $region2: #{_shared_prompter_impl.1} parent=0 // loop_pre_header
    _
  $region3: #{_shared_prompter_impl.1} parent=0 // loop_header
    %s8 = sphi 0, %s12
    %p9 = scmp.ge.s32.totalorder %s8, 4
    %s18 = sphi 0, %s20
    %s21 = sphi 0, %s18
    %s22 = sphi 0, %s21
    %s38 = sphi 0, %s22
    %s42 = sphi 0, %s42
    %s44 = sphi 0, %s42
    %s45 = sphi 0, %s44
    %s59 = sphi 0, %s45
    %s65 = sphi 0, %s67
    %s68 = sphi 0, %s65
    %s69 = sphi 0, %s68
    %s85 = sphi 0, %s69
  $region4: #{_shared_prompter_impl.1} parent=0 // loop_header_branch
    %11 = sbr.rel (%p9) target = $region8
  $region5: #{_shared_prompter_impl.1} parent=0 // loop_body
    %s13 = ssub.s32 %s8, 1
    %s14 = ssub.s32 %s8, 2
    %s15 = sadd.s32 %s8, 1
    %s16 = ssub.s32 %s8, %s15
    %p17 = scmp.eq.s32.totalorder %s16, 0
    %s19 = sadd.s32 %s18, 1
    %s20 = scalar_select %p17, %s18, %s19
    %p23 = pneg %p17
    %p24 = scmp.eq.s32.totalorder %s8, 1
    %p25 = por %p23, %p24
    %p26 = scmp.ne.s32.totalorder %s18, %s21
    %p27 = scmp.eq.s32.totalorder %s8, 0
    %p28 = por %p26, %p27
    %p29 = scmp.ne.s32.totalorder %s18, %s21
    %p30 = scmp.eq.s32.totalorder %s13, 1
    %p31 = por %p29, %p30
    %p32 = scmp.ne.s32.totalorder %s21, %s22
    %p33 = scmp.eq.s32.totalorder %s13, 0
    %p34 = por %p32, %p33
    %p35 = scmp.ne.s32.totalorder %s21, %s22
    %p36 = scmp.eq.s32.totalorder %s14, 1
    %p37 = por %p35, %p36
    %p39 = scmp.ne.s32.totalorder %s22, %s38
    %p40 = scmp.eq.s32.totalorder %s14, 0
    %p41 = por %p39, %p40
    %s43 = sadd.s32 %s42, 1
    %p46 = scmp.eq.s32.totalorder %s8, 1
    %p47 = scmp.ne.s32.totalorder %s42, %s44
    %p48 = scmp.eq.s32.totalorder %s8, 0
    %p49 = por %p47, %p48
    %p50 = scmp.ne.s32.totalorder %s42, %s44
    %p51 = scmp.eq.s32.totalorder %s13, 1
    %p52 = por %p50, %p51
    %p53 = scmp.ne.s32.totalorder %s44, %s45
    %p54 = scmp.eq.s32.totalorder %s13, 0
    %p55 = por %p53, %p54
    %p56 = scmp.ne.s32.totalorder %s44, %s45
    %p57 = scmp.eq.s32.totalorder %s14, 1
    %p58 = por %p56, %p57
    %p60 = scmp.ne.s32.totalorder %s45, %s59
    %p61 = scmp.eq.s32.totalorder %s14, 0
    %p62 = por %p60, %p61
    %s63 = ssub.s32 %s8, %s15
    %p64 = scmp.eq.s32.totalorder %s63, 0
    %s66 = sadd.s32 %s65, 1
    %s67 = scalar_select %p64, %s65, %s66
    %p70 = pneg %p64
    %p71 = scmp.eq.s32.totalorder %s8, 1
    %p72 = por %p70, %p71
    %p73 = scmp.ne.s32.totalorder %s65, %s68
    %p74 = scmp.eq.s32.totalorder %s8, 0
    %p75 = por %p73, %p74
    %p76 = scmp.ne.s32.totalorder %s65, %s68
    %p77 = scmp.eq.s32.totalorder %s13, 1
    %p78 = por %p76, %p77
    %p79 = scmp.ne.s32.totalorder %s68, %s69
    %p80 = scmp.eq.s32.totalorder %s13, 0
    %p81 = por %p79, %p80
    %p82 = scmp.ne.s32.totalorder %s68, %s69
    %p83 = scmp.eq.s32.totalorder %s14, 1
    %p84 = por %p82, %p83
    %p86 = scmp.ne.s32.totalorder %s69, %s85
    %p87 = scmp.eq.s32.totalorder %s14, 0
    %p88 = por %p86, %p87
    %p89 = scmp.le.s32.totalorder 1, %s8
    %p90 = scmp.lt.s32.totalorder %s8, 3
    %p91 = pnand %p89, %p90
    %p92 = pneg %p91
    // Predicated region
    $region9: #{_shared_prompter_impl.1} parent=5 // pred_check
      _
    $region10: #{_shared_prompter_impl.1} parent=5 // pred_check_branch
      %94 = sbr.rel (%p91) target = $region12
    $region11: #{_shared_prompter_impl.1} parent=5 // pred_region
      %s95 = ssub.s32 %s8, 1
      // Predicated region
      $region13: #{_shared_prompter_impl.1} parent=11 // pred_check
        %p96 = pneg %p55
      $region14: #{_shared_prompter_impl.1} parent=11 // pred_check_branch
        %98 = sbr.rel (%p96) target = $region16
      $region15: #{_shared_prompter_impl.1} parent=11 // pred_region
        _
      $region16: #{_shared_prompter_impl.1} parent=11 // pred_fallthru
        _
    $region12: #{_shared_prompter_impl.1} parent=5 // pred_fallthru
      _
    %p99 = scmp.lt.s32.totalorder %s8, 2
    // Predicated region
    $region17: #{_shared_prompter_impl.1} parent=5 // pred_check
      %p100 = pneg %p99
    $region18: #{_shared_prompter_impl.1} parent=5 // pred_check_branch
      %102 = sbr.rel (%p100) target = $region20
    $region19: #{_shared_prompter_impl.1} parent=5 // pred_region
      // Predicated region
      $region21: #{_shared_prompter_impl.1} parent=19 // pred_check
        %p103 = pneg %p28
      $region22: #{_shared_prompter_impl.1} parent=19 // pred_check_branch
        %105 = sbr.rel (%p103) target = $region24
      $region23: #{_shared_prompter_impl.1} parent=19 // pred_region
        %p106 = scmp.lt.s32.totalorder %s8, 1
        %s107 = scalar_select %p106, %s8, 1
        %s108 = smul.addr %s107, 8
        %s109 = smul.addr %s108, 4
        %s110 = scalar_lea.vmem %s0, %s109
      $region24: #{_shared_prompter_impl.1} parent=19 // pred_fallthru
        _
    $region20: #{_shared_prompter_impl.1} parent=5 // pred_fallthru
      _
    %p111 = scmp.le.s32.totalorder 1, %s8
    %p112 = scmp.lt.s32.totalorder %s8, 3
    %p113 = pnand %p111, %p112
    %p114 = pneg %p113
    // Predicated region
    $region25: #{_shared_prompter_impl.1} parent=5 // pred_check
      _
    $region26: #{_shared_prompter_impl.1} parent=5 // pred_check_branch
      %116 = sbr.rel (%p113) target = $region28
    $region27: #{_shared_prompter_impl.1} parent=5 // pred_region
      %s117 = ssub.s32 %s8, 1
      %p118 = scmp.lt.s32.totalorder %s13, 1
      %s119 = scalar_select %p118, %s13, 1
      %s120 = smul.addr %s119, 8
      %s121 = smul.addr %s120, 4
      %s122 = scalar_lea.vmem %s0, %s121
      %p123 = pneg %p34
      %p124 = pneg %p31
      %p125 = pneg %p55
      %p126 = pneg %p52
      %p127 = pneg %p81
      %p128 = pneg %p78
      %p129 = scmp.lt.s32.totalorder %s13, 1
      %s130 = scalar_select %p129, %s13, 1
      %s131 = smul.addr %s130, 8
      %s132 = smul.addr %s131, 4
      %s133 = scalar_lea.vmem %s2, %s132
      %p134 = scmp.lt.s32.totalorder %s13, 1
      %s135 = scalar_select %p134, %s13, 1
      %s136 = smul.addr %s135, 8
      %s137 = smul.addr %s136, 4
      %s138 = scalar_lea.vmem %s0, %s137
      %p139 = scmp.lt.s32.totalorder %s13, 1
      %s140 = scalar_select %p139, %s13, 1
      %s141 = smul.addr %s140, 8
      %s142 = smul.addr %s141, 4
      %s143 = scalar_lea.vmem %s2, %s142
      %v144 = vld [vmem:[%s138] sm:$0x77]
      %v145 = vld [vmem:[%s138 + $0x8] sm:$0x77]
      %v146 = vld [vmem:[%s138 + $0x10] sm:$0x77]
      %v147 = vld [vmem:[%s138 + $0x18] sm:$0x77]
      %v148 = vld [vmem:[%s1] sm:$0x77]
      %v149 = vld [vmem:[%s1 + $0x8] sm:$0x77]
      %v150 = vld [vmem:[%s1 + $0x10] sm:$0x77]
      %v151 = vld [vmem:[%s1 + $0x18] sm:$0x77]
      %v152 = vadd.f32 %v144, %v148
      %v153 = vadd.f32 %v145, %v149
      %v154 = vadd.f32 %v146, %v150
      %v155 = vadd.f32 %v147, %v151
      %156 = vst [vmem:[%s143] sm:$0x77] %v152
      %157 = vst [vmem:[%s143 + $0x8] sm:$0x77] %v153
      %158 = vst [vmem:[%s143 + $0x10] sm:$0x77] %v154
      %159 = vst [vmem:[%s143 + $0x18] sm:$0x77] %v155
      %p160 = scmp.lt.s32.totalorder %s13, 1
      %s161 = scalar_select %p160, %s13, 1
      %s162 = smul.addr %s161, 8
      %s163 = smul.addr %s162, 4
      %s164 = scalar_lea.vmem %s2, %s163
      // Predicated region
      $region29: #{_shared_prompter_impl.1} parent=27 // pred_check
        %p165 = pneg %p78
      $region30: #{_shared_prompter_impl.1} parent=27 // pred_check_branch
        %167 = sbr.rel (%p165) target = $region32
      $region31: #{_shared_prompter_impl.1} parent=27 // pred_region
        _
      $region32: #{_shared_prompter_impl.1} parent=27 // pred_fallthru
        _
    $region28: #{_shared_prompter_impl.1} parent=5 // pred_fallthru
      _
    %p168 = scmp.le.s32.totalorder 2, %s8
    // Predicated region
    $region33: #{_shared_prompter_impl.1} parent=5 // pred_check
      %p169 = pneg %p168
    $region34: #{_shared_prompter_impl.1} parent=5 // pred_check_branch
      %171 = sbr.rel (%p169) target = $region36
    $region35: #{_shared_prompter_impl.1} parent=5 // pred_region
      %s172 = ssub.s32 %s8, 2
      // Predicated region
      $region37: #{_shared_prompter_impl.1} parent=35 // pred_check
        %p173 = pneg %p84
      $region38: #{_shared_prompter_impl.1} parent=35 // pred_check_branch
        %175 = sbr.rel (%p173) target = $region40
      $region39: #{_shared_prompter_impl.1} parent=35 // pred_region
        %p176 = scmp.lt.s32.totalorder %s14, 1
        %s177 = scalar_select %p176, %s14, 1
        %s178 = smul.addr %s177, 8
        %s179 = smul.addr %s178, 4
        %s180 = scalar_lea.vmem %s2, %s179
      $region40: #{_shared_prompter_impl.1} parent=35 // pred_fallthru
        _
    $region36: #{_shared_prompter_impl.1} parent=5 // pred_fallthru
      _
  $region6: #{_shared_prompter_impl.1} parent=0 // loop_footer
    %s12 = sadd.s32 1, %s8
  $region7: #{_shared_prompter_impl.1} parent=0 // loop_footer_branch
    %7 = sbr.rel target = $region3
  $region8: #{_shared_prompter_impl.1} parent=0 // loop_exit
    _

</llo_original>
